<compile_context>
chip_gen: v5e
topology: v5e:2x2
jax: 0.10.0
libtpu: 0.0.40
codegen_flags: <defaults>
</compile_context>

<pallas_src>
import jax
import jax.numpy as jnp
from jax.experimental import pallas as pl
from jax.experimental.pallas import tpu as pltpu

INPUT_SIZE = 4
HIDDEN_SIZE = 2
NUM_LAYERS = 2   # hard-wired as two explicit cells below
FC1_OUT = 128
SEQ_LEN = 8
BATCH = 2

# Row layout of the packed (WBUF_ROWS, 128) weight buffer (cols beyond the
# listed width are zero padding):
ROW_WIH0 = 0      # 4 rows, cols 0:8    wih0^T               (I, 4H)
ROW_WH0C = 4      # 2 rows, cols 0:16   [wih1^T | whh0^T]    (H, 8H)
ROW_WHH1 = 6      # 2 rows, cols 0:8    whh1^T               (H, 4H)
ROW_B0 = 8        # 1 row,  cols 0:8    b_ih0 + b_hh0
ROW_B1 = 9        # 1 row,  cols 0:8    b_ih1 + b_hh1
ROW_FC1W = 10     # 2 rows, cols 0:128  fc_1 weight^T        (H, 128)
ROW_FC1B = 12     # 1 row,  cols 0:128  fc_1 bias
ROW_FCW = 13      # 1 row,  cols 0:128  fc weight (as (1,128))
ROW_FCB = 14      # 1 row,  col 0       fc bias
WBUF_ROWS = 16


def lstm1_kernel(x_ref, w_ref, out_ref, z_ref):
    """Single-invocation kernel: 2-layer LSTM recurrence + MLP head, all VPU.

    x_ref   : (T*B, I)       raw input rows (time-major)
    w_ref   : (16, 128)      packed weights/biases (see ROW_* layout)
    out_ref : (T*B, 1)       final output
    z_ref   : (T*B, 128)     VMEM scratch holding per-step fc_1 pre-activations
    """
    TB, I = x_ref.shape
    B = BATCH
    T = TB // B
    H = HIDDEN_SIZE
    G = 4 * H

    # ---- prologue: unpack + pre-broadcast weight rows (loop-invariant) ----
    wih0_rows = [jnp.broadcast_to(w_ref[ROW_WIH0 + i:ROW_WIH0 + i + 1, 0:G],
                                  (B, G)) for i in range(I)]
    w0c_r0 = jnp.broadcast_to(w_ref[ROW_WH0C:ROW_WH0C + 1, 0:2 * G], (B, 2 * G))
    w0c_r1 = jnp.broadcast_to(w_ref[ROW_WH0C + 1:ROW_WH0C + 2, 0:2 * G], (B, 2 * G))
    whh1_r0 = jnp.broadcast_to(w_ref[ROW_WHH1:ROW_WHH1 + 1, 0:G], (B, G))
    whh1_r1 = jnp.broadcast_to(w_ref[ROW_WHH1 + 1:ROW_WHH1 + 2, 0:G], (B, G))
    b0_b = jnp.broadcast_to(w_ref[ROW_B0:ROW_B0 + 1, 0:G], (B, G))
    b1_b = jnp.broadcast_to(w_ref[ROW_B1:ROW_B1 + 1, 0:G], (B, G))
    fc1w_r0 = jnp.broadcast_to(w_ref[ROW_FC1W:ROW_FC1W + 1, :], (B, FC1_OUT))
    fc1w_r1 = jnp.broadcast_to(w_ref[ROW_FC1W + 1:ROW_FC1W + 2, :], (B, FC1_OUT))
    fc1b_b = jnp.broadcast_to(w_ref[ROW_FC1B:ROW_FC1B + 1, :], (B, FC1_OUT))
    fcw_b = jnp.broadcast_to(w_ref[ROW_FCW:ROW_FCW + 1, :], (TB, FC1_OUT))
    fcb = w_ref[ROW_FCB:ROW_FCB + 1, 0:1]                       # (1, 1)

    def gate_update(gates, c):
        # Full-vector activations (one vreg each), then static lane slices.
        # PyTorch gate order: i, f, g, o.
        sg = jax.nn.sigmoid(gates)
        tg = jnp.tanh(gates)
        i = sg[:, 0:H]
        f = sg[:, H:2 * H]
        o = sg[:, 3 * H:4 * H]
        g = tg[:, 2 * H:3 * H]
        c_new = f * c + i * g
        h_new = o * jnp.tanh(c_new)
        return h_new, c_new

    zeros_h = jnp.zeros((B, H), jnp.float32)
    c0 = zeros_h
    c1 = zeros_h
    h0_whh0 = jnp.zeros((B, G), jnp.float32)    # h0(t-1) @ Whh0 (zero init state)
    h1_whh1 = jnp.zeros((B, G), jnp.float32)    # h1(t-1) @ Whh1

    # T is tiny and static: fully unrolled, static ref indices, no MXU.  The
    # serial chain per step is: gate activations (EUP) + a couple of VPU
    # broadcast-mul-adds; input projections are off the chain.
    for t in range(T):
        # Layer-0 input projection: 4 VPU mul-adds, independent of recurrence.
        x_t = x_ref[pl.ds(t * B, B), :]                          # (B, I)
        xp_t = b0_b
        for i in range(I):
            xp_t = xp_t + x_t[:, i:i + 1] * wih0_rows[i]

        g0 = xp_t + h0_whh0
        h0, c0 = gate_update(g0, c0)

        # Fused [Wih1 | Whh0] projection of h0: K=2 -> two lane-broadcast
        # multiplies + one add on the VPU (no MXU, no runtime concat).
        p = h0[:, 0:1] * w0c_r0 + h0[:, 1:2] * w0c_r1            # (B, 2G)
        g1 = p[:, 0:G] + h1_whh1 + b1_b
        h0_whh0 = p[:, G:2 * G]

        h1, c1 = gate_update(g1, c1)
        h1_whh1 = h1[:, 0:1] * whh1_r0 + h1[:, 1:2] * whh1_r1

        # fc_1 fused per step (K=H=2): lane-dense (B,128) row into scratch.
        y = jnp.maximum(h1, 0.0)
        z_ref[pl.ds(t * B, B), :] = (y[:, 0:1] * fc1w_r0
                                     + y[:, 1:2] * fc1w_r1 + fc1b_b)

    # ---- head epilogue: ReLU -> (* fcw) -> cross-lane reduce -> + fcb ----
    z = jnp.maximum(z_ref[...], 0.0)                             # (TB, 128)
    out = jnp.sum(z * fcw_b, axis=-1, keepdims=True) + fcb       # (TB, 1)
    out_ref[...] = out                                           # single store


def pack_params(params):
    """Pack all weights/biases into one lane-padded (16,128) f32 buffer."""
    (wih0_t, whh0_t, b0, wih1_t, whh1_t, b1,
     fc1w_t, fc1b, fcw_t, fcb) = params

    # Column-stack [Wih1 | Whh0]: both consume h0 inside the kernel.
    w_h0c = jnp.concatenate([wih1_t, whh0_t], axis=1)            # (H, 8H)

    def put(buf, row, arr):
        r, c = arr.shape
        return buf.at[row:row + r, 0:c].set(arr)

    wbuf = jnp.zeros((WBUF_ROWS, 128), jnp.float32)
    wbuf = put(wbuf, ROW_WIH0, wih0_t)       # (4, 8)
    wbuf = put(wbuf, ROW_WH0C, w_h0c)        # (2, 16)
    wbuf = put(wbuf, ROW_WHH1, whh1_t)       # (2, 8)
    wbuf = put(wbuf, ROW_B0, b0)             # (1, 8)
    wbuf = put(wbuf, ROW_B1, b1)             # (1, 8)
    wbuf = put(wbuf, ROW_FC1W, fc1w_t)       # (2, 128)
    wbuf = put(wbuf, ROW_FC1B, fc1b)         # (1, 128)
    wbuf = put(wbuf, ROW_FCW, fcw_t.T)       # (1, 128)
    wbuf = put(wbuf, ROW_FCB, fcb)           # (1, 1)
    return wbuf


def lstm1_forward(x, wbuf):
    """x: (T, B, INPUT_SIZE) f32, wbuf: packed weights -> (T, B, 1) f32."""
    T, B, I = x.shape
    x2 = x.reshape(T * B, I)

    vmem = lambda: pl.BlockSpec(memory_space=pltpu.MemorySpace.VMEM)

    out_flat = pl.pallas_call(
        lstm1_kernel,
        out_shape=jax.ShapeDtypeStruct((T * B, 1), jnp.float32),
        in_specs=[vmem(), vmem()],           # exactly 2 input DMAs
        out_specs=vmem(),
        scratch_shapes=[pltpu.VMEM((T * B, FC1_OUT), jnp.float32)],
    )(x2, wbuf)

    return out_flat.reshape(T, B, 1)


def init_params(key):
    """Deterministic params, PyTorch-style uniform(-1/sqrt(H), 1/sqrt(H))."""
    H, I = HIDDEN_SIZE, INPUT_SIZE
    k = 1.0 / jnp.sqrt(jnp.float32(H))
    ks = jax.random.split(key, 14)
    u = lambda kk, shape, bound: jax.random.uniform(
        kk, shape, jnp.float32, -bound, bound)

    # layer 0 (input I -> H), layer 1 (input H -> H); pre-transposed for x @ W
    wih0_t = u(ks[0], (I, 4 * H), k)
    whh0_t = u(ks[1], (H, 4 * H), k)
    b0 = u(ks[2], (1, 4 * H), k) + u(ks[3], (1, 4 * H), k)   # b_ih + b_hh
    wih1_t = u(ks[4], (H, 4 * H), k)
    whh1_t = u(ks[5], (H, 4 * H), k)
    b1 = u(ks[6], (1, 4 * H), k) + u(ks[7], (1, 4 * H), k)

    k1 = 1.0 / jnp.sqrt(jnp.float32(H))
    fc1w_t = u(ks[8], (H, FC1_OUT), k1)
    fc1b = u(ks[9], (1, FC1_OUT), k1)
    k2 = 1.0 / jnp.sqrt(jnp.float32(FC1_OUT))
    fcw_t = u(ks[10], (FC1_OUT, 1), k2)
    fcb = u(ks[11], (1, 1), k2)

    return (wih0_t, whh0_t, b0, wih1_t, whh1_t, b1, fc1w_t, fc1b, fcw_t, fcb)


def reference_forward(x, params):
    """Pure-JAX reference of the PyTorch forward for validation."""
    (wih0_t, whh0_t, b0, wih1_t, whh1_t, b1,
     fc1w_t, fc1b, fcw_t, fcb) = params
    H = HIDDEN_SIZE
    B = x.shape[1]

    def lstm_layer(inp, wih_t, whh_t, b):
        def step(carry, x_t):
            h, c = carry
            gates = x_t @ wih_t + h @ whh_t + b
            i = jax.nn.sigmoid(gates[:, 0:H])
            f = jax.nn.sigmoid(gates[:, H:2 * H])
            g = jnp.tanh(gates[:, 2 * H:3 * H])
            o = jax.nn.sigmoid(gates[:, 3 * H:4 * H])
            c = f * c + i * g
            h = o * jnp.tanh(c)
            return (h, c), h
        init = (jnp.zeros((B, H), jnp.float32), jnp.zeros((B, H), jnp.float32))
        _, hs = jax.lax.scan(step, init, inp)
        return hs

    h = lstm_layer(x, wih0_t, whh0_t, b0)
    h = lstm_layer(h, wih1_t, whh1_t, b1)
    y = jnp.maximum(h, 0.0)
    z = jnp.maximum(y @ fc1w_t + fc1b, 0.0)
    return z @ fcw_t + fcb               # (T, B, 1); squeeze(1) no-op for B>1


if __name__ == "__main__":
    key = jax.random.PRNGKey(0)
    kx, kp = jax.random.split(key)
    x = jax.random.normal(kx, (SEQ_LEN, BATCH, INPUT_SIZE), jnp.float32)
    params = init_params(kp)

    # Weight packing happens once, outside the per-call path.
    wbuf = jax.block_until_ready(pack_params(params))

    fwd = jax.jit(lstm1_forward)
    out = jax.block_until_ready(fwd(x, wbuf))

    with jax.default_matmul_precision("highest"):
        ref = reference_forward(x, params)

    assert out.shape == (SEQ_LEN, BATCH, 1)
    assert jnp.allclose(out, ref, atol=1e-5, rtol=1e-5), "mismatch vs reference"

    print("KERNEL_OK")
</pallas_src>

<mosaic_0001>
module attributes {stable_mosaic.version = 11 : i64} {
  func.func @lstm1_kernel(%arg0: memref<16x4xf32, #tpu.memory_space<vmem>>, %arg1: memref<16x128xf32, #tpu.memory_space<vmem>>, %arg2: memref<16x1xf32, #tpu.memory_space<vmem>>, %arg3: memref<16x128xf32, #tpu.memory_space<vmem>>) attributes {dimension_semantics = [], scalar_prefetch = 0 : i64, scratch_operands = 1 : i64, tpu.core_type = #tpu.core_type<tc>} {
    %c0 = arith.constant 0 : index
    %c0_0 = arith.constant 0 : index
    %0 = vector.load %arg1[%c0, %c0_0] : memref<16x128xf32, #tpu.memory_space<vmem>>, vector<1x8xf32>
    %1 = vector.shape_cast %0 : vector<1x8xf32> to vector<1x8xf32>
    %2 = vector.broadcast %1 : vector<1x8xf32> to vector<2x8xf32>
    %c1 = arith.constant 1 : index
    %c0_1 = arith.constant 0 : index
    %3 = vector.load %arg1[%c1, %c0_1] : memref<16x128xf32, #tpu.memory_space<vmem>>, vector<1x8xf32>
    %4 = vector.shape_cast %3 : vector<1x8xf32> to vector<1x8xf32>
    %5 = vector.broadcast %4 : vector<1x8xf32> to vector<2x8xf32>
    %c2 = arith.constant 2 : index
    %c0_2 = arith.constant 0 : index
    %6 = vector.load %arg1[%c2, %c0_2] : memref<16x128xf32, #tpu.memory_space<vmem>>, vector<1x8xf32>
    %7 = vector.shape_cast %6 : vector<1x8xf32> to vector<1x8xf32>
    %8 = vector.broadcast %7 : vector<1x8xf32> to vector<2x8xf32>
    %c3 = arith.constant 3 : index
    %c0_3 = arith.constant 0 : index
    %9 = vector.load %arg1[%c3, %c0_3] : memref<16x128xf32, #tpu.memory_space<vmem>>, vector<1x8xf32>
    %10 = vector.shape_cast %9 : vector<1x8xf32> to vector<1x8xf32>
    %11 = vector.broadcast %10 : vector<1x8xf32> to vector<2x8xf32>
    %c4 = arith.constant 4 : index
    %c0_4 = arith.constant 0 : index
    %12 = vector.load %arg1[%c4, %c0_4] : memref<16x128xf32, #tpu.memory_space<vmem>>, vector<1x16xf32>
    %13 = vector.shape_cast %12 : vector<1x16xf32> to vector<1x16xf32>
    %14 = vector.broadcast %13 : vector<1x16xf32> to vector<2x16xf32>
    %c5 = arith.constant 5 : index
    %c0_5 = arith.constant 0 : index
    %15 = vector.load %arg1[%c5, %c0_5] : memref<16x128xf32, #tpu.memory_space<vmem>>, vector<1x16xf32>
    %16 = vector.shape_cast %15 : vector<1x16xf32> to vector<1x16xf32>
    %17 = vector.broadcast %16 : vector<1x16xf32> to vector<2x16xf32>
    %c6 = arith.constant 6 : index
    %c0_6 = arith.constant 0 : index
    %18 = vector.load %arg1[%c6, %c0_6] : memref<16x128xf32, #tpu.memory_space<vmem>>, vector<1x8xf32>
    %19 = vector.shape_cast %18 : vector<1x8xf32> to vector<1x8xf32>
    %20 = vector.broadcast %19 : vector<1x8xf32> to vector<2x8xf32>
    %c7 = arith.constant 7 : index
    %c0_7 = arith.constant 0 : index
    %21 = vector.load %arg1[%c7, %c0_7] : memref<16x128xf32, #tpu.memory_space<vmem>>, vector<1x8xf32>
    %22 = vector.shape_cast %21 : vector<1x8xf32> to vector<1x8xf32>
    %23 = vector.broadcast %22 : vector<1x8xf32> to vector<2x8xf32>
    %c8 = arith.constant 8 : index
    %c0_8 = arith.constant 0 : index
    %24 = vector.load %arg1[%c8, %c0_8] : memref<16x128xf32, #tpu.memory_space<vmem>>, vector<1x8xf32>
    %25 = vector.shape_cast %24 : vector<1x8xf32> to vector<1x8xf32>
    %26 = vector.broadcast %25 : vector<1x8xf32> to vector<2x8xf32>
    %c9 = arith.constant 9 : index
    %c0_9 = arith.constant 0 : index
    %27 = vector.load %arg1[%c9, %c0_9] : memref<16x128xf32, #tpu.memory_space<vmem>>, vector<1x8xf32>
    %28 = vector.shape_cast %27 : vector<1x8xf32> to vector<1x8xf32>
    %29 = vector.broadcast %28 : vector<1x8xf32> to vector<2x8xf32>
    %c10 = arith.constant 10 : index
    %c0_10 = arith.constant 0 : index
    %30 = vector.load %arg1[%c10, %c0_10] : memref<16x128xf32, #tpu.memory_space<vmem>>, vector<1x128xf32>
    %31 = vector.shape_cast %30 : vector<1x128xf32> to vector<1x128xf32>
    %32 = vector.broadcast %31 : vector<1x128xf32> to vector<2x128xf32>
    %c11 = arith.constant 11 : index
    %c0_11 = arith.constant 0 : index
    %33 = vector.load %arg1[%c11, %c0_11] : memref<16x128xf32, #tpu.memory_space<vmem>>, vector<1x128xf32>
    %34 = vector.shape_cast %33 : vector<1x128xf32> to vector<1x128xf32>
    %35 = vector.broadcast %34 : vector<1x128xf32> to vector<2x128xf32>
    %c12 = arith.constant 12 : index
    %c0_12 = arith.constant 0 : index
    %36 = vector.load %arg1[%c12, %c0_12] : memref<16x128xf32, #tpu.memory_space<vmem>>, vector<1x128xf32>
    %37 = vector.shape_cast %36 : vector<1x128xf32> to vector<1x128xf32>
    %38 = vector.broadcast %37 : vector<1x128xf32> to vector<2x128xf32>
    %c13 = arith.constant 13 : index
    %c0_13 = arith.constant 0 : index
    %39 = vector.load %arg1[%c13, %c0_13] : memref<16x128xf32, #tpu.memory_space<vmem>>, vector<1x128xf32>
    %40 = vector.shape_cast %39 : vector<1x128xf32> to vector<1x128xf32>
    %41 = vector.broadcast %40 : vector<1x128xf32> to vector<16x128xf32>
    %c14 = arith.constant 14 : index
    %c0_14 = arith.constant 0 : index
    %42 = vector.load %arg1[%c14, %c0_14] : memref<16x128xf32, #tpu.memory_space<vmem>>, vector<1x1xf32>
    %cst = arith.constant 0.000000e+00 : f32
    %43 = vector.broadcast %cst : f32 to vector<2x2xf32>
    %cst_15 = arith.constant 0.000000e+00 : f32
    %44 = vector.broadcast %cst_15 : f32 to vector<2x8xf32>
    %cst_16 = arith.constant 0.000000e+00 : f32
    %45 = vector.broadcast %cst_16 : f32 to vector<2x8xf32>
    %c0_17 = arith.constant 0 : index
    %c0_18 = arith.constant 0 : index
    %46 = vector.load %arg0[%c0_17, %c0_18] : memref<16x4xf32, #tpu.memory_space<vmem>>, vector<2x4xf32>
    %47 = vector.extract_strided_slice %46 {offsets = [0, 0], sizes = [2, 1], strides = [1, 1]} : vector<2x4xf32> to vector<2x1xf32>
    %48 = vector.broadcast %47 : vector<2x1xf32> to vector<2x8xf32>
    %49 = arith.mulf %48, %2 : vector<2x8xf32>
    %50 = arith.addf %26, %49 : vector<2x8xf32>
    %51 = vector.extract_strided_slice %46 {offsets = [0, 1], sizes = [2, 1], strides = [1, 1]} : vector<2x4xf32> to vector<2x1xf32>
    %52 = vector.broadcast %51 : vector<2x1xf32> to vector<2x8xf32>
    %53 = arith.mulf %52, %5 : vector<2x8xf32>
    %54 = arith.addf %50, %53 : vector<2x8xf32>
    %55 = vector.extract_strided_slice %46 {offsets = [0, 2], sizes = [2, 1], strides = [1, 1]} : vector<2x4xf32> to vector<2x1xf32>
    %56 = vector.broadcast %55 : vector<2x1xf32> to vector<2x8xf32>
    %57 = arith.mulf %56, %8 : vector<2x8xf32>
    %58 = arith.addf %54, %57 : vector<2x8xf32>
    %59 = vector.extract_strided_slice %46 {offsets = [0, 3], sizes = [2, 1], strides = [1, 1]} : vector<2x4xf32> to vector<2x1xf32>
    %60 = vector.broadcast %59 : vector<2x1xf32> to vector<2x8xf32>
    %61 = arith.mulf %60, %11 : vector<2x8xf32>
    %62 = arith.addf %58, %61 : vector<2x8xf32>
    %63 = arith.addf %62, %44 : vector<2x8xf32>
    %64 = arith.negf %63 : vector<2x8xf32>
    %65 = math.exp %64 : vector<2x8xf32>
    %cst_19 = arith.constant 1.000000e+00 : f32
    %66 = vector.broadcast %cst_19 : f32 to vector<2x8xf32>
    %67 = arith.addf %66, %65 : vector<2x8xf32>
    %68 = arith.divf %66, %67 : vector<2x8xf32>
    %69 = math.tanh %63 : vector<2x8xf32>
    %70 = vector.extract_strided_slice %68 {offsets = [0, 0], sizes = [2, 2], strides = [1, 1]} : vector<2x8xf32> to vector<2x2xf32>
    %71 = vector.extract_strided_slice %68 {offsets = [0, 2], sizes = [2, 2], strides = [1, 1]} : vector<2x8xf32> to vector<2x2xf32>
    %72 = vector.extract_strided_slice %68 {offsets = [0, 6], sizes = [2, 2], strides = [1, 1]} : vector<2x8xf32> to vector<2x2xf32>
    %73 = vector.extract_strided_slice %69 {offsets = [0, 4], sizes = [2, 2], strides = [1, 1]} : vector<2x8xf32> to vector<2x2xf32>
    %74 = arith.mulf %71, %43 : vector<2x2xf32>
    %75 = arith.mulf %70, %73 : vector<2x2xf32>
    %76 = arith.addf %74, %75 : vector<2x2xf32>
    %77 = math.tanh %76 : vector<2x2xf32>
    %78 = arith.mulf %72, %77 : vector<2x2xf32>
    %79 = vector.extract_strided_slice %78 {offsets = [0, 0], sizes = [2, 1], strides = [1, 1]} : vector<2x2xf32> to vector<2x1xf32>
    %80 = vector.broadcast %79 : vector<2x1xf32> to vector<2x16xf32>
    %81 = arith.mulf %80, %14 : vector<2x16xf32>
    %82 = vector.extract_strided_slice %78 {offsets = [0, 1], sizes = [2, 1], strides = [1, 1]} : vector<2x2xf32> to vector<2x1xf32>
    %83 = vector.broadcast %82 : vector<2x1xf32> to vector<2x16xf32>
    %84 = arith.mulf %83, %17 : vector<2x16xf32>
    %85 = arith.addf %81, %84 : vector<2x16xf32>
    %86 = vector.extract_strided_slice %85 {offsets = [0, 0], sizes = [2, 8], strides = [1, 1]} : vector<2x16xf32> to vector<2x8xf32>
    %87 = arith.addf %86, %45 : vector<2x8xf32>
    %88 = arith.addf %87, %29 : vector<2x8xf32>
    %89 = vector.extract_strided_slice %85 {offsets = [0, 8], sizes = [2, 8], strides = [1, 1]} : vector<2x16xf32> to vector<2x8xf32>
    %90 = arith.negf %88 : vector<2x8xf32>
    %91 = math.exp %90 : vector<2x8xf32>
    %cst_20 = arith.constant 1.000000e+00 : f32
    %92 = vector.broadcast %cst_20 : f32 to vector<2x8xf32>
    %93 = arith.addf %92, %91 : vector<2x8xf32>
    %94 = arith.divf %92, %93 : vector<2x8xf32>
    %95 = math.tanh %88 : vector<2x8xf32>
    %96 = vector.extract_strided_slice %94 {offsets = [0, 0], sizes = [2, 2], strides = [1, 1]} : vector<2x8xf32> to vector<2x2xf32>
    %97 = vector.extract_strided_slice %94 {offsets = [0, 2], sizes = [2, 2], strides = [1, 1]} : vector<2x8xf32> to vector<2x2xf32>
    %98 = vector.extract_strided_slice %94 {offsets = [0, 6], sizes = [2, 2], strides = [1, 1]} : vector<2x8xf32> to vector<2x2xf32>
    %99 = vector.extract_strided_slice %95 {offsets = [0, 4], sizes = [2, 2], strides = [1, 1]} : vector<2x8xf32> to vector<2x2xf32>
    %100 = arith.mulf %97, %43 : vector<2x2xf32>
    %101 = arith.mulf %96, %99 : vector<2x2xf32>
    %102 = arith.addf %100, %101 : vector<2x2xf32>
    %103 = math.tanh %102 : vector<2x2xf32>
    %104 = arith.mulf %98, %103 : vector<2x2xf32>
    %105 = vector.extract_strided_slice %104 {offsets = [0, 0], sizes = [2, 1], strides = [1, 1]} : vector<2x2xf32> to vector<2x1xf32>
    %106 = vector.broadcast %105 : vector<2x1xf32> to vector<2x8xf32>
    %107 = arith.mulf %106, %20 : vector<2x8xf32>
    %108 = vector.extract_strided_slice %104 {offsets = [0, 1], sizes = [2, 1], strides = [1, 1]} : vector<2x2xf32> to vector<2x1xf32>
    %109 = vector.broadcast %108 : vector<2x1xf32> to vector<2x8xf32>
    %110 = arith.mulf %109, %23 : vector<2x8xf32>
    %111 = arith.addf %107, %110 : vector<2x8xf32>
    %cst_21 = arith.constant 0.000000e+00 : f32
    %112 = vector.broadcast %cst_21 : f32 to vector<2x2xf32>
    %113 = arith.maximumf %104, %112 : vector<2x2xf32>
    %114 = vector.extract_strided_slice %113 {offsets = [0, 0], sizes = [2, 1], strides = [1, 1]} : vector<2x2xf32> to vector<2x1xf32>
    %115 = vector.broadcast %114 : vector<2x1xf32> to vector<2x128xf32>
    %116 = arith.mulf %115, %32 : vector<2x128xf32>
    %117 = vector.extract_strided_slice %113 {offsets = [0, 1], sizes = [2, 1], strides = [1, 1]} : vector<2x2xf32> to vector<2x1xf32>
    %118 = vector.broadcast %117 : vector<2x1xf32> to vector<2x128xf32>
    %119 = arith.mulf %118, %35 : vector<2x128xf32>
    %120 = arith.addf %116, %119 : vector<2x128xf32>
    %121 = arith.addf %120, %38 : vector<2x128xf32>
    %c0_22 = arith.constant 0 : index
    %c0_23 = arith.constant 0 : index
    %122 = vector.load %arg3[%c0_22, %c0_23] : memref<16x128xf32, #tpu.memory_space<vmem>>, vector<2x128xf32>
    tpu.vector_store %arg3[%c0_22, %c0_23], %121 {strides = array<i32>} : memref<16x128xf32, #tpu.memory_space<vmem>>, vector<2x128xf32>,
    %c2_24 = arith.constant 2 : index
    %c0_25 = arith.constant 0 : index
    %123 = vector.load %arg0[%c2_24, %c0_25] : memref<16x4xf32, #tpu.memory_space<vmem>>, vector<2x4xf32>
    %124 = vector.extract_strided_slice %123 {offsets = [0, 0], sizes = [2, 1], strides = [1, 1]} : vector<2x4xf32> to vector<2x1xf32>
    %125 = vector.broadcast %124 : vector<2x1xf32> to vector<2x8xf32>
    %126 = arith.mulf %125, %2 : vector<2x8xf32>
    %127 = arith.addf %26, %126 : vector<2x8xf32>
    %128 = vector.extract_strided_slice %123 {offsets = [0, 1], sizes = [2, 1], strides = [1, 1]} : vector<2x4xf32> to vector<2x1xf32>
    %129 = vector.broadcast %128 : vector<2x1xf32> to vector<2x8xf32>
    %130 = arith.mulf %129, %5 : vector<2x8xf32>
    %131 = arith.addf %127, %130 : vector<2x8xf32>
    %132 = vector.extract_strided_slice %123 {offsets = [0, 2], sizes = [2, 1], strides = [1, 1]} : vector<2x4xf32> to vector<2x1xf32>
    %133 = vector.broadcast %132 : vector<2x1xf32> to vector<2x8xf32>
    %134 = arith.mulf %133, %8 : vector<2x8xf32>
    %135 = arith.addf %131, %134 : vector<2x8xf32>
    %136 = vector.extract_strided_slice %123 {offsets = [0, 3], sizes = [2, 1], strides = [1, 1]} : vector<2x4xf32> to vector<2x1xf32>
    %137 = vector.broadcast %136 : vector<2x1xf32> to vector<2x8xf32>
    %138 = arith.mulf %137, %11 : vector<2x8xf32>
    %139 = arith.addf %135, %138 : vector<2x8xf32>
    %140 = arith.addf %139, %89 : vector<2x8xf32>
    %141 = arith.negf %140 : vector<2x8xf32>
    %142 = math.exp %141 : vector<2x8xf32>
    %cst_26 = arith.constant 1.000000e+00 : f32
    %143 = vector.broadcast %cst_26 : f32 to vector<2x8xf32>
    %144 = arith.addf %143, %142 : vector<2x8xf32>
    %145 = arith.divf %143, %144 : vector<2x8xf32>
    %146 = math.tanh %140 : vector<2x8xf32>
    %147 = vector.extract_strided_slice %145 {offsets = [0, 0], sizes = [2, 2], strides = [1, 1]} : vector<2x8xf32> to vector<2x2xf32>
    %148 = vector.extract_strided_slice %145 {offsets = [0, 2], sizes = [2, 2], strides = [1, 1]} : vector<2x8xf32> to vector<2x2xf32>
    %149 = vector.extract_strided_slice %145 {offsets = [0, 6], sizes = [2, 2], strides = [1, 1]} : vector<2x8xf32> to vector<2x2xf32>
    %150 = vector.extract_strided_slice %146 {offsets = [0, 4], sizes = [2, 2], strides = [1, 1]} : vector<2x8xf32> to vector<2x2xf32>
    %151 = arith.mulf %148, %76 : vector<2x2xf32>
    %152 = arith.mulf %147, %150 : vector<2x2xf32>
    %153 = arith.addf %151, %152 : vector<2x2xf32>
    %154 = math.tanh %153 : vector<2x2xf32>
    %155 = arith.mulf %149, %154 : vector<2x2xf32>
    %156 = vector.extract_strided_slice %155 {offsets = [0, 0], sizes = [2, 1], strides = [1, 1]} : vector<2x2xf32> to vector<2x1xf32>
    %157 = vector.broadcast %156 : vector<2x1xf32> to vector<2x16xf32>
    %158 = arith.mulf %157, %14 : vector<2x16xf32>
    %159 = vector.extract_strided_slice %155 {offsets = [0, 1], sizes = [2, 1], strides = [1, 1]} : vector<2x2xf32> to vector<2x1xf32>
    %160 = vector.broadcast %159 : vector<2x1xf32> to vector<2x16xf32>
    %161 = arith.mulf %160, %17 : vector<2x16xf32>
    %162 = arith.addf %158, %161 : vector<2x16xf32>
    %163 = vector.extract_strided_slice %162 {offsets = [0, 0], sizes = [2, 8], strides = [1, 1]} : vector<2x16xf32> to vector<2x8xf32>
    %164 = arith.addf %163, %111 : vector<2x8xf32>
    %165 = arith.addf %164, %29 : vector<2x8xf32>
    %166 = vector.extract_strided_slice %162 {offsets = [0, 8], sizes = [2, 8], strides = [1, 1]} : vector<2x16xf32> to vector<2x8xf32>
    %167 = arith.negf %165 : vector<2x8xf32>
    %168 = math.exp %167 : vector<2x8xf32>
    %cst_27 = arith.constant 1.000000e+00 : f32
    %169 = vector.broadcast %cst_27 : f32 to vector<2x8xf32>
    %170 = arith.addf %169, %168 : vector<2x8xf32>
    %171 = arith.divf %169, %170 : vector<2x8xf32>
    %172 = math.tanh %165 : vector<2x8xf32>
    %173 = vector.extract_strided_slice %171 {offsets = [0, 0], sizes = [2, 2], strides = [1, 1]} : vector<2x8xf32> to vector<2x2xf32>
    %174 = vector.extract_strided_slice %171 {offsets = [0, 2], sizes = [2, 2], strides = [1, 1]} : vector<2x8xf32> to vector<2x2xf32>
    %175 = vector.extract_strided_slice %171 {offsets = [0, 6], sizes = [2, 2], strides = [1, 1]} : vector<2x8xf32> to vector<2x2xf32>
    %176 = vector.extract_strided_slice %172 {offsets = [0, 4], sizes = [2, 2], strides = [1, 1]} : vector<2x8xf32> to vector<2x2xf32>
    %177 = arith.mulf %174, %102 : vector<2x2xf32>
    %178 = arith.mulf %173, %176 : vector<2x2xf32>
    %179 = arith.addf %177, %178 : vector<2x2xf32>
    %180 = math.tanh %179 : vector<2x2xf32>
    %181 = arith.mulf %175, %180 : vector<2x2xf32>
    %182 = vector.extract_strided_slice %181 {offsets = [0, 0], sizes = [2, 1], strides = [1, 1]} : vector<2x2xf32> to vector<2x1xf32>
    %183 = vector.broadcast %182 : vector<2x1xf32> to vector<2x8xf32>
    %184 = arith.mulf %183, %20 : vector<2x8xf32>
    %185 = vector.extract_strided_slice %181 {offsets = [0, 1], sizes = [2, 1], strides = [1, 1]} : vector<2x2xf32> to vector<2x1xf32>
    %186 = vector.broadcast %185 : vector<2x1xf32> to vector<2x8xf32>
    %187 = arith.mulf %186, %23 : vector<2x8xf32>
    %188 = arith.addf %184, %187 : vector<2x8xf32>
    %cst_28 = arith.constant 0.000000e+00 : f32
    %189 = vector.broadcast %cst_28 : f32 to vector<2x2xf32>
    %190 = arith.maximumf %181, %189 : vector<2x2xf32>
    %191 = vector.extract_strided_slice %190 {offsets = [0, 0], sizes = [2, 1], strides = [1, 1]} : vector<2x2xf32> to vector<2x1xf32>
    %192 = vector.broadcast %191 : vector<2x1xf32> to vector<2x128xf32>
    %193 = arith.mulf %192, %32 : vector<2x128xf32>
    %194 = vector.extract_strided_slice %190 {offsets = [0, 1], sizes = [2, 1], strides = [1, 1]} : vector<2x2xf32> to vector<2x1xf32>
    %195 = vector.broadcast %194 : vector<2x1xf32> to vector<2x128xf32>
    %196 = arith.mulf %195, %35 : vector<2x128xf32>
    %197 = arith.addf %193, %196 : vector<2x128xf32>
    %198 = arith.addf %197, %38 : vector<2x128xf32>
    %c2_29 = arith.constant 2 : index
    %c0_30 = arith.constant 0 : index
    %199 = vector.load %arg3[%c2_29, %c0_30] : memref<16x128xf32, #tpu.memory_space<vmem>>, vector<2x128xf32>
    tpu.vector_store %arg3[%c2_29, %c0_30], %198 {strides = array<i32>} : memref<16x128xf32, #tpu.memory_space<vmem>>, vector<2x128xf32>,
    %c4_31 = arith.constant 4 : index
    %c0_32 = arith.constant 0 : index
    %200 = vector.load %arg0[%c4_31, %c0_32] : memref<16x4xf32, #tpu.memory_space<vmem>>, vector<2x4xf32>
    %201 = vector.extract_strided_slice %200 {offsets = [0, 0], sizes = [2, 1], strides = [1, 1]} : vector<2x4xf32> to vector<2x1xf32>
    %202 = vector.broadcast %201 : vector<2x1xf32> to vector<2x8xf32>
    %203 = arith.mulf %202, %2 : vector<2x8xf32>
    %204 = arith.addf %26, %203 : vector<2x8xf32>
    %205 = vector.extract_strided_slice %200 {offsets = [0, 1], sizes = [2, 1], strides = [1, 1]} : vector<2x4xf32> to vector<2x1xf32>
    %206 = vector.broadcast %205 : vector<2x1xf32> to vector<2x8xf32>
    %207 = arith.mulf %206, %5 : vector<2x8xf32>
    %208 = arith.addf %204, %207 : vector<2x8xf32>
    %209 = vector.extract_strided_slice %200 {offsets = [0, 2], sizes = [2, 1], strides = [1, 1]} : vector<2x4xf32> to vector<2x1xf32>
    %210 = vector.broadcast %209 : vector<2x1xf32> to vector<2x8xf32>
    %211 = arith.mulf %210, %8 : vector<2x8xf32>
    %212 = arith.addf %208, %211 : vector<2x8xf32>
    %213 = vector.extract_strided_slice %200 {offsets = [0, 3], sizes = [2, 1], strides = [1, 1]} : vector<2x4xf32> to vector<2x1xf32>
    %214 = vector.broadcast %213 : vector<2x1xf32> to vector<2x8xf32>
    %215 = arith.mulf %214, %11 : vector<2x8xf32>
    %216 = arith.addf %212, %215 : vector<2x8xf32>
    %217 = arith.addf %216, %166 : vector<2x8xf32>
    %218 = arith.negf %217 : vector<2x8xf32>
    %219 = math.exp %218 : vector<2x8xf32>
    %cst_33 = arith.constant 1.000000e+00 : f32
    %220 = vector.broadcast %cst_33 : f32 to vector<2x8xf32>
    %221 = arith.addf %220, %219 : vector<2x8xf32>
    %222 = arith.divf %220, %221 : vector<2x8xf32>
    %223 = math.tanh %217 : vector<2x8xf32>
    %224 = vector.extract_strided_slice %222 {offsets = [0, 0], sizes = [2, 2], strides = [1, 1]} : vector<2x8xf32> to vector<2x2xf32>
    %225 = vector.extract_strided_slice %222 {offsets = [0, 2], sizes = [2, 2], strides = [1, 1]} : vector<2x8xf32> to vector<2x2xf32>
    %226 = vector.extract_strided_slice %222 {offsets = [0, 6], sizes = [2, 2], strides = [1, 1]} : vector<2x8xf32> to vector<2x2xf32>
    %227 = vector.extract_strided_slice %223 {offsets = [0, 4], sizes = [2, 2], strides = [1, 1]} : vector<2x8xf32> to vector<2x2xf32>
    %228 = arith.mulf %225, %153 : vector<2x2xf32>
    %229 = arith.mulf %224, %227 : vector<2x2xf32>
    %230 = arith.addf %228, %229 : vector<2x2xf32>
    %231 = math.tanh %230 : vector<2x2xf32>
    %232 = arith.mulf %226, %231 : vector<2x2xf32>
    %233 = vector.extract_strided_slice %232 {offsets = [0, 0], sizes = [2, 1], strides = [1, 1]} : vector<2x2xf32> to vector<2x1xf32>
    %234 = vector.broadcast %233 : vector<2x1xf32> to vector<2x16xf32>
    %235 = arith.mulf %234, %14 : vector<2x16xf32>
    %236 = vector.extract_strided_slice %232 {offsets = [0, 1], sizes = [2, 1], strides = [1, 1]} : vector<2x2xf32> to vector<2x1xf32>
    %237 = vector.broadcast %236 : vector<2x1xf32> to vector<2x16xf32>
    %238 = arith.mulf %237, %17 : vector<2x16xf32>
    %239 = arith.addf %235, %238 : vector<2x16xf32>
    %240 = vector.extract_strided_slice %239 {offsets = [0, 0], sizes = [2, 8], strides = [1, 1]} : vector<2x16xf32> to vector<2x8xf32>
    %241 = arith.addf %240, %188 : vector<2x8xf32>
    %242 = arith.addf %241, %29 : vector<2x8xf32>
    %243 = vector.extract_strided_slice %239 {offsets = [0, 8], sizes = [2, 8], strides = [1, 1]} : vector<2x16xf32> to vector<2x8xf32>
    %244 = arith.negf %242 : vector<2x8xf32>
    %245 = math.exp %244 : vector<2x8xf32>
    %cst_34 = arith.constant 1.000000e+00 : f32
    %246 = vector.broadcast %cst_34 : f32 to vector<2x8xf32>
    %247 = arith.addf %246, %245 : vector<2x8xf32>
    %248 = arith.divf %246, %247 : vector<2x8xf32>
    %249 = math.tanh %242 : vector<2x8xf32>
    %250 = vector.extract_strided_slice %248 {offsets = [0, 0], sizes = [2, 2], strides = [1, 1]} : vector<2x8xf32> to vector<2x2xf32>
    %251 = vector.extract_strided_slice %248 {offsets = [0, 2], sizes = [2, 2], strides = [1, 1]} : vector<2x8xf32> to vector<2x2xf32>
    %252 = vector.extract_strided_slice %248 {offsets = [0, 6], sizes = [2, 2], strides = [1, 1]} : vector<2x8xf32> to vector<2x2xf32>
    %253 = vector.extract_strided_slice %249 {offsets = [0, 4], sizes = [2, 2], strides = [1, 1]} : vector<2x8xf32> to vector<2x2xf32>
    %254 = arith.mulf %251, %179 : vector<2x2xf32>
    %255 = arith.mulf %250, %253 : vector<2x2xf32>
    %256 = arith.addf %254, %255 : vector<2x2xf32>
    %257 = math.tanh %256 : vector<2x2xf32>
    %258 = arith.mulf %252, %257 : vector<2x2xf32>
    %259 = vector.extract_strided_slice %258 {offsets = [0, 0], sizes = [2, 1], strides = [1, 1]} : vector<2x2xf32> to vector<2x1xf32>
    %260 = vector.broadcast %259 : vector<2x1xf32> to vector<2x8xf32>
    %261 = arith.mulf %260, %20 : vector<2x8xf32>
    %262 = vector.extract_strided_slice %258 {offsets = [0, 1], sizes = [2, 1], strides = [1, 1]} : vector<2x2xf32> to vector<2x1xf32>
    %263 = vector.broadcast %262 : vector<2x1xf32> to vector<2x8xf32>
    %264 = arith.mulf %263, %23 : vector<2x8xf32>
    %265 = arith.addf %261, %264 : vector<2x8xf32>
    %cst_35 = arith.constant 0.000000e+00 : f32
    %266 = vector.broadcast %cst_35 : f32 to vector<2x2xf32>
    %267 = arith.maximumf %258, %266 : vector<2x2xf32>
    %268 = vector.extract_strided_slice %267 {offsets = [0, 0], sizes = [2, 1], strides = [1, 1]} : vector<2x2xf32> to vector<2x1xf32>
    %269 = vector.broadcast %268 : vector<2x1xf32> to vector<2x128xf32>
    %270 = arith.mulf %269, %32 : vector<2x128xf32>
    %271 = vector.extract_strided_slice %267 {offsets = [0, 1], sizes = [2, 1], strides = [1, 1]} : vector<2x2xf32> to vector<2x1xf32>
    %272 = vector.broadcast %271 : vector<2x1xf32> to vector<2x128xf32>
    %273 = arith.mulf %272, %35 : vector<2x128xf32>
    %274 = arith.addf %270, %273 : vector<2x128xf32>
    %275 = arith.addf %274, %38 : vector<2x128xf32>
    %c4_36 = arith.constant 4 : index
    %c0_37 = arith.constant 0 : index
    %276 = vector.load %arg3[%c4_36, %c0_37] : memref<16x128xf32, #tpu.memory_space<vmem>>, vector<2x128xf32>
    tpu.vector_store %arg3[%c4_36, %c0_37], %275 {strides = array<i32>} : memref<16x128xf32, #tpu.memory_space<vmem>>, vector<2x128xf32>,
    %c6_38 = arith.constant 6 : index
    %c0_39 = arith.constant 0 : index
    %277 = vector.load %arg0[%c6_38, %c0_39] : memref<16x4xf32, #tpu.memory_space<vmem>>, vector<2x4xf32>
    %278 = vector.extract_strided_slice %277 {offsets = [0, 0], sizes = [2, 1], strides = [1, 1]} : vector<2x4xf32> to vector<2x1xf32>
    %279 = vector.broadcast %278 : vector<2x1xf32> to vector<2x8xf32>
    %280 = arith.mulf %279, %2 : vector<2x8xf32>
    %281 = arith.addf %26, %280 : vector<2x8xf32>
    %282 = vector.extract_strided_slice %277 {offsets = [0, 1], sizes = [2, 1], strides = [1, 1]} : vector<2x4xf32> to vector<2x1xf32>
    %283 = vector.broadcast %282 : vector<2x1xf32> to vector<2x8xf32>
    %284 = arith.mulf %283, %5 : vector<2x8xf32>
    %285 = arith.addf %281, %284 : vector<2x8xf32>
    %286 = vector.extract_strided_slice %277 {offsets = [0, 2], sizes = [2, 1], strides = [1, 1]} : vector<2x4xf32> to vector<2x1xf32>
    %287 = vector.broadcast %286 : vector<2x1xf32> to vector<2x8xf32>
    %288 = arith.mulf %287, %8 : vector<2x8xf32>
    %289 = arith.addf %285, %288 : vector<2x8xf32>
    %290 = vector.extract_strided_slice %277 {offsets = [0, 3], sizes = [2, 1], strides = [1, 1]} : vector<2x4xf32> to vector<2x1xf32>
    %291 = vector.broadcast %290 : vector<2x1xf32> to vector<2x8xf32>
    %292 = arith.mulf %291, %11 : vector<2x8xf32>
    %293 = arith.addf %289, %292 : vector<2x8xf32>
    %294 = arith.addf %293, %243 : vector<2x8xf32>
    %295 = arith.negf %294 : vector<2x8xf32>
    %296 = math.exp %295 : vector<2x8xf32>
    %cst_40 = arith.constant 1.000000e+00 : f32
    %297 = vector.broadcast %cst_40 : f32 to vector<2x8xf32>
    %298 = arith.addf %297, %296 : vector<2x8xf32>
    %299 = arith.divf %297, %298 : vector<2x8xf32>
    %300 = math.tanh %294 : vector<2x8xf32>
    %301 = vector.extract_strided_slice %299 {offsets = [0, 0], sizes = [2, 2], strides = [1, 1]} : vector<2x8xf32> to vector<2x2xf32>
    %302 = vector.extract_strided_slice %299 {offsets = [0, 2], sizes = [2, 2], strides = [1, 1]} : vector<2x8xf32> to vector<2x2xf32>
    %303 = vector.extract_strided_slice %299 {offsets = [0, 6], sizes = [2, 2], strides = [1, 1]} : vector<2x8xf32> to vector<2x2xf32>
    %304 = vector.extract_strided_slice %300 {offsets = [0, 4], sizes = [2, 2], strides = [1, 1]} : vector<2x8xf32> to vector<2x2xf32>
    %305 = arith.mulf %302, %230 : vector<2x2xf32>
    %306 = arith.mulf %301, %304 : vector<2x2xf32>
    %307 = arith.addf %305, %306 : vector<2x2xf32>
    %308 = math.tanh %307 : vector<2x2xf32>
    %309 = arith.mulf %303, %308 : vector<2x2xf32>
    %310 = vector.extract_strided_slice %309 {offsets = [0, 0], sizes = [2, 1], strides = [1, 1]} : vector<2x2xf32> to vector<2x1xf32>
    %311 = vector.broadcast %310 : vector<2x1xf32> to vector<2x16xf32>
    %312 = arith.mulf %311, %14 : vector<2x16xf32>
    %313 = vector.extract_strided_slice %309 {offsets = [0, 1], sizes = [2, 1], strides = [1, 1]} : vector<2x2xf32> to vector<2x1xf32>
    %314 = vector.broadcast %313 : vector<2x1xf32> to vector<2x16xf32>
    %315 = arith.mulf %314, %17 : vector<2x16xf32>
    %316 = arith.addf %312, %315 : vector<2x16xf32>
    %317 = vector.extract_strided_slice %316 {offsets = [0, 0], sizes = [2, 8], strides = [1, 1]} : vector<2x16xf32> to vector<2x8xf32>
    %318 = arith.addf %317, %265 : vector<2x8xf32>
    %319 = arith.addf %318, %29 : vector<2x8xf32>
    %320 = vector.extract_strided_slice %316 {offsets = [0, 8], sizes = [2, 8], strides = [1, 1]} : vector<2x16xf32> to vector<2x8xf32>
    %321 = arith.negf %319 : vector<2x8xf32>
    %322 = math.exp %321 : vector<2x8xf32>
    %cst_41 = arith.constant 1.000000e+00 : f32
    %323 = vector.broadcast %cst_41 : f32 to vector<2x8xf32>
    %324 = arith.addf %323, %322 : vector<2x8xf32>
    %325 = arith.divf %323, %324 : vector<2x8xf32>
    %326 = math.tanh %319 : vector<2x8xf32>
    %327 = vector.extract_strided_slice %325 {offsets = [0, 0], sizes = [2, 2], strides = [1, 1]} : vector<2x8xf32> to vector<2x2xf32>
    %328 = vector.extract_strided_slice %325 {offsets = [0, 2], sizes = [2, 2], strides = [1, 1]} : vector<2x8xf32> to vector<2x2xf32>
    %329 = vector.extract_strided_slice %325 {offsets = [0, 6], sizes = [2, 2], strides = [1, 1]} : vector<2x8xf32> to vector<2x2xf32>
    %330 = vector.extract_strided_slice %326 {offsets = [0, 4], sizes = [2, 2], strides = [1, 1]} : vector<2x8xf32> to vector<2x2xf32>
    %331 = arith.mulf %328, %256 : vector<2x2xf32>
    %332 = arith.mulf %327, %330 : vector<2x2xf32>
    %333 = arith.addf %331, %332 : vector<2x2xf32>
    %334 = math.tanh %333 : vector<2x2xf32>
    %335 = arith.mulf %329, %334 : vector<2x2xf32>
    %336 = vector.extract_strided_slice %335 {offsets = [0, 0], sizes = [2, 1], strides = [1, 1]} : vector<2x2xf32> to vector<2x1xf32>
    %337 = vector.broadcast %336 : vector<2x1xf32> to vector<2x8xf32>
    %338 = arith.mulf %337, %20 : vector<2x8xf32>
    %339 = vector.extract_strided_slice %335 {offsets = [0, 1], sizes = [2, 1], strides = [1, 1]} : vector<2x2xf32> to vector<2x1xf32>
    %340 = vector.broadcast %339 : vector<2x1xf32> to vector<2x8xf32>
    %341 = arith.mulf %340, %23 : vector<2x8xf32>
    %342 = arith.addf %338, %341 : vector<2x8xf32>
    %cst_42 = arith.constant 0.000000e+00 : f32
    %343 = vector.broadcast %cst_42 : f32 to vector<2x2xf32>
    %344 = arith.maximumf %335, %343 : vector<2x2xf32>
    %345 = vector.extract_strided_slice %344 {offsets = [0, 0], sizes = [2, 1], strides = [1, 1]} : vector<2x2xf32> to vector<2x1xf32>
    %346 = vector.broadcast %345 : vector<2x1xf32> to vector<2x128xf32>
    %347 = arith.mulf %346, %32 : vector<2x128xf32>
    %348 = vector.extract_strided_slice %344 {offsets = [0, 1], sizes = [2, 1], strides = [1, 1]} : vector<2x2xf32> to vector<2x1xf32>
    %349 = vector.broadcast %348 : vector<2x1xf32> to vector<2x128xf32>
    %350 = arith.mulf %349, %35 : vector<2x128xf32>
    %351 = arith.addf %347, %350 : vector<2x128xf32>
    %352 = arith.addf %351, %38 : vector<2x128xf32>
    %c6_43 = arith.constant 6 : index
    %c0_44 = arith.constant 0 : index
    %353 = vector.load %arg3[%c6_43, %c0_44] : memref<16x128xf32, #tpu.memory_space<vmem>>, vector<2x128xf32>
    tpu.vector_store %arg3[%c6_43, %c0_44], %352 {strides = array<i32>} : memref<16x128xf32, #tpu.memory_space<vmem>>, vector<2x128xf32>,
    %c8_45 = arith.constant 8 : index
    %c0_46 = arith.constant 0 : index
    %354 = vector.load %arg0[%c8_45, %c0_46] : memref<16x4xf32, #tpu.memory_space<vmem>>, vector<2x4xf32>
    %355 = vector.extract_strided_slice %354 {offsets = [0, 0], sizes = [2, 1], strides = [1, 1]} : vector<2x4xf32> to vector<2x1xf32>
    %356 = vector.broadcast %355 : vector<2x1xf32> to vector<2x8xf32>
    %357 = arith.mulf %356, %2 : vector<2x8xf32>
    %358 = arith.addf %26, %357 : vector<2x8xf32>
    %359 = vector.extract_strided_slice %354 {offsets = [0, 1], sizes = [2, 1], strides = [1, 1]} : vector<2x4xf32> to vector<2x1xf32>
    %360 = vector.broadcast %359 : vector<2x1xf32> to vector<2x8xf32>
    %361 = arith.mulf %360, %5 : vector<2x8xf32>
    %362 = arith.addf %358, %361 : vector<2x8xf32>
    %363 = vector.extract_strided_slice %354 {offsets = [0, 2], sizes = [2, 1], strides = [1, 1]} : vector<2x4xf32> to vector<2x1xf32>
    %364 = vector.broadcast %363 : vector<2x1xf32> to vector<2x8xf32>
    %365 = arith.mulf %364, %8 : vector<2x8xf32>
    %366 = arith.addf %362, %365 : vector<2x8xf32>
    %367 = vector.extract_strided_slice %354 {offsets = [0, 3], sizes = [2, 1], strides = [1, 1]} : vector<2x4xf32> to vector<2x1xf32>
    %368 = vector.broadcast %367 : vector<2x1xf32> to vector<2x8xf32>
    %369 = arith.mulf %368, %11 : vector<2x8xf32>
    %370 = arith.addf %366, %369 : vector<2x8xf32>
    %371 = arith.addf %370, %320 : vector<2x8xf32>
    %372 = arith.negf %371 : vector<2x8xf32>
    %373 = math.exp %372 : vector<2x8xf32>
    %cst_47 = arith.constant 1.000000e+00 : f32
    %374 = vector.broadcast %cst_47 : f32 to vector<2x8xf32>
    %375 = arith.addf %374, %373 : vector<2x8xf32>
    %376 = arith.divf %374, %375 : vector<2x8xf32>
    %377 = math.tanh %371 : vector<2x8xf32>
    %378 = vector.extract_strided_slice %376 {offsets = [0, 0], sizes = [2, 2], strides = [1, 1]} : vector<2x8xf32> to vector<2x2xf32>
    %379 = vector.extract_strided_slice %376 {offsets = [0, 2], sizes = [2, 2], strides = [1, 1]} : vector<2x8xf32> to vector<2x2xf32>
    %380 = vector.extract_strided_slice %376 {offsets = [0, 6], sizes = [2, 2], strides = [1, 1]} : vector<2x8xf32> to vector<2x2xf32>
    %381 = vector.extract_strided_slice %377 {offsets = [0, 4], sizes = [2, 2], strides = [1, 1]} : vector<2x8xf32> to vector<2x2xf32>
    %382 = arith.mulf %379, %307 : vector<2x2xf32>
    %383 = arith.mulf %378, %381 : vector<2x2xf32>
    %384 = arith.addf %382, %383 : vector<2x2xf32>
    %385 = math.tanh %384 : vector<2x2xf32>
    %386 = arith.mulf %380, %385 : vector<2x2xf32>
    %387 = vector.extract_strided_slice %386 {offsets = [0, 0], sizes = [2, 1], strides = [1, 1]} : vector<2x2xf32> to vector<2x1xf32>
    %388 = vector.broadcast %387 : vector<2x1xf32> to vector<2x16xf32>
    %389 = arith.mulf %388, %14 : vector<2x16xf32>
    %390 = vector.extract_strided_slice %386 {offsets = [0, 1], sizes = [2, 1], strides = [1, 1]} : vector<2x2xf32> to vector<2x1xf32>
    %391 = vector.broadcast %390 : vector<2x1xf32> to vector<2x16xf32>
    %392 = arith.mulf %391, %17 : vector<2x16xf32>
    %393 = arith.addf %389, %392 : vector<2x16xf32>
    %394 = vector.extract_strided_slice %393 {offsets = [0, 0], sizes = [2, 8], strides = [1, 1]} : vector<2x16xf32> to vector<2x8xf32>
    %395 = arith.addf %394, %342 : vector<2x8xf32>
    %396 = arith.addf %395, %29 : vector<2x8xf32>
    %397 = vector.extract_strided_slice %393 {offsets = [0, 8], sizes = [2, 8], strides = [1, 1]} : vector<2x16xf32> to vector<2x8xf32>
    %398 = arith.negf %396 : vector<2x8xf32>
    %399 = math.exp %398 : vector<2x8xf32>
    %cst_48 = arith.constant 1.000000e+00 : f32
    %400 = vector.broadcast %cst_48 : f32 to vector<2x8xf32>
    %401 = arith.addf %400, %399 : vector<2x8xf32>
    %402 = arith.divf %400, %401 : vector<2x8xf32>
    %403 = math.tanh %396 : vector<2x8xf32>
    %404 = vector.extract_strided_slice %402 {offsets = [0, 0], sizes = [2, 2], strides = [1, 1]} : vector<2x8xf32> to vector<2x2xf32>
    %405 = vector.extract_strided_slice %402 {offsets = [0, 2], sizes = [2, 2], strides = [1, 1]} : vector<2x8xf32> to vector<2x2xf32>
    %406 = vector.extract_strided_slice %402 {offsets = [0, 6], sizes = [2, 2], strides = [1, 1]} : vector<2x8xf32> to vector<2x2xf32>
    %407 = vector.extract_strided_slice %403 {offsets = [0, 4], sizes = [2, 2], strides = [1, 1]} : vector<2x8xf32> to vector<2x2xf32>
    %408 = arith.mulf %405, %333 : vector<2x2xf32>
    %409 = arith.mulf %404, %407 : vector<2x2xf32>
    %410 = arith.addf %408, %409 : vector<2x2xf32>
    %411 = math.tanh %410 : vector<2x2xf32>
    %412 = arith.mulf %406, %411 : vector<2x2xf32>
    %413 = vector.extract_strided_slice %412 {offsets = [0, 0], sizes = [2, 1], strides = [1, 1]} : vector<2x2xf32> to vector<2x1xf32>
    %414 = vector.broadcast %413 : vector<2x1xf32> to vector<2x8xf32>
    %415 = arith.mulf %414, %20 : vector<2x8xf32>
    %416 = vector.extract_strided_slice %412 {offsets = [0, 1], sizes = [2, 1], strides = [1, 1]} : vector<2x2xf32> to vector<2x1xf32>
    %417 = vector.broadcast %416 : vector<2x1xf32> to vector<2x8xf32>
    %418 = arith.mulf %417, %23 : vector<2x8xf32>
    %419 = arith.addf %415, %418 : vector<2x8xf32>
    %cst_49 = arith.constant 0.000000e+00 : f32
    %420 = vector.broadcast %cst_49 : f32 to vector<2x2xf32>
    %421 = arith.maximumf %412, %420 : vector<2x2xf32>
    %422 = vector.extract_strided_slice %421 {offsets = [0, 0], sizes = [2, 1], strides = [1, 1]} : vector<2x2xf32> to vector<2x1xf32>
    %423 = vector.broadcast %422 : vector<2x1xf32> to vector<2x128xf32>
    %424 = arith.mulf %423, %32 : vector<2x128xf32>
    %425 = vector.extract_strided_slice %421 {offsets = [0, 1], sizes = [2, 1], strides = [1, 1]} : vector<2x2xf32> to vector<2x1xf32>
    %426 = vector.broadcast %425 : vector<2x1xf32> to vector<2x128xf32>
    %427 = arith.mulf %426, %35 : vector<2x128xf32>
    %428 = arith.addf %424, %427 : vector<2x128xf32>
    %429 = arith.addf %428, %38 : vector<2x128xf32>
    %c8_50 = arith.constant 8 : index
    %c0_51 = arith.constant 0 : index
    %430 = vector.load %arg3[%c8_50, %c0_51] : memref<16x128xf32, #tpu.memory_space<vmem>>, vector<2x128xf32>
    tpu.vector_store %arg3[%c8_50, %c0_51], %429 {strides = array<i32>} : memref<16x128xf32, #tpu.memory_space<vmem>>, vector<2x128xf32>,
    %c10_52 = arith.constant 10 : index
    %c0_53 = arith.constant 0 : index
    %431 = vector.load %arg0[%c10_52, %c0_53] : memref<16x4xf32, #tpu.memory_space<vmem>>, vector<2x4xf32>
    %432 = vector.extract_strided_slice %431 {offsets = [0, 0], sizes = [2, 1], strides = [1, 1]} : vector<2x4xf32> to vector<2x1xf32>
    %433 = vector.broadcast %432 : vector<2x1xf32> to vector<2x8xf32>
    %434 = arith.mulf %433, %2 : vector<2x8xf32>
    %435 = arith.addf %26, %434 : vector<2x8xf32>
    %436 = vector.extract_strided_slice %431 {offsets = [0, 1], sizes = [2, 1], strides = [1, 1]} : vector<2x4xf32> to vector<2x1xf32>
    %437 = vector.broadcast %436 : vector<2x1xf32> to vector<2x8xf32>
    %438 = arith.mulf %437, %5 : vector<2x8xf32>
    %439 = arith.addf %435, %438 : vector<2x8xf32>
    %440 = vector.extract_strided_slice %431 {offsets = [0, 2], sizes = [2, 1], strides = [1, 1]} : vector<2x4xf32> to vector<2x1xf32>
    %441 = vector.broadcast %440 : vector<2x1xf32> to vector<2x8xf32>
    %442 = arith.mulf %441, %8 : vector<2x8xf32>
    %443 = arith.addf %439, %442 : vector<2x8xf32>
    %444 = vector.extract_strided_slice %431 {offsets = [0, 3], sizes = [2, 1], strides = [1, 1]} : vector<2x4xf32> to vector<2x1xf32>
    %445 = vector.broadcast %444 : vector<2x1xf32> to vector<2x8xf32>
    %446 = arith.mulf %445, %11 : vector<2x8xf32>
    %447 = arith.addf %443, %446 : vector<2x8xf32>
    %448 = arith.addf %447, %397 : vector<2x8xf32>
    %449 = arith.negf %448 : vector<2x8xf32>
    %450 = math.exp %449 : vector<2x8xf32>
    %cst_54 = arith.constant 1.000000e+00 : f32
    %451 = vector.broadcast %cst_54 : f32 to vector<2x8xf32>
    %452 = arith.addf %451, %450 : vector<2x8xf32>
    %453 = arith.divf %451, %452 : vector<2x8xf32>
    %454 = math.tanh %448 : vector<2x8xf32>
    %455 = vector.extract_strided_slice %453 {offsets = [0, 0], sizes = [2, 2], strides = [1, 1]} : vector<2x8xf32> to vector<2x2xf32>
    %456 = vector.extract_strided_slice %453 {offsets = [0, 2], sizes = [2, 2], strides = [1, 1]} : vector<2x8xf32> to vector<2x2xf32>
    %457 = vector.extract_strided_slice %453 {offsets = [0, 6], sizes = [2, 2], strides = [1, 1]} : vector<2x8xf32> to vector<2x2xf32>
    %458 = vector.extract_strided_slice %454 {offsets = [0, 4], sizes = [2, 2], strides = [1, 1]} : vector<2x8xf32> to vector<2x2xf32>
    %459 = arith.mulf %456, %384 : vector<2x2xf32>
    %460 = arith.mulf %455, %458 : vector<2x2xf32>
    %461 = arith.addf %459, %460 : vector<2x2xf32>
    %462 = math.tanh %461 : vector<2x2xf32>
    %463 = arith.mulf %457, %462 : vector<2x2xf32>
    %464 = vector.extract_strided_slice %463 {offsets = [0, 0], sizes = [2, 1], strides = [1, 1]} : vector<2x2xf32> to vector<2x1xf32>
    %465 = vector.broadcast %464 : vector<2x1xf32> to vector<2x16xf32>
    %466 = arith.mulf %465, %14 : vector<2x16xf32>
    %467 = vector.extract_strided_slice %463 {offsets = [0, 1], sizes = [2, 1], strides = [1, 1]} : vector<2x2xf32> to vector<2x1xf32>
    %468 = vector.broadcast %467 : vector<2x1xf32> to vector<2x16xf32>
    %469 = arith.mulf %468, %17 : vector<2x16xf32>
    %470 = arith.addf %466, %469 : vector<2x16xf32>
    %471 = vector.extract_strided_slice %470 {offsets = [0, 0], sizes = [2, 8], strides = [1, 1]} : vector<2x16xf32> to vector<2x8xf32>
    %472 = arith.addf %471, %419 : vector<2x8xf32>
    %473 = arith.addf %472, %29 : vector<2x8xf32>
    %474 = vector.extract_strided_slice %470 {offsets = [0, 8], sizes = [2, 8], strides = [1, 1]} : vector<2x16xf32> to vector<2x8xf32>
    %475 = arith.negf %473 : vector<2x8xf32>
    %476 = math.exp %475 : vector<2x8xf32>
    %cst_55 = arith.constant 1.000000e+00 : f32
    %477 = vector.broadcast %cst_55 : f32 to vector<2x8xf32>
    %478 = arith.addf %477, %476 : vector<2x8xf32>
    %479 = arith.divf %477, %478 : vector<2x8xf32>
    %480 = math.tanh %473 : vector<2x8xf32>
    %481 = vector.extract_strided_slice %479 {offsets = [0, 0], sizes = [2, 2], strides = [1, 1]} : vector<2x8xf32> to vector<2x2xf32>
    %482 = vector.extract_strided_slice %479 {offsets = [0, 2], sizes = [2, 2], strides = [1, 1]} : vector<2x8xf32> to vector<2x2xf32>
    %483 = vector.extract_strided_slice %479 {offsets = [0, 6], sizes = [2, 2], strides = [1, 1]} : vector<2x8xf32> to vector<2x2xf32>
    %484 = vector.extract_strided_slice %480 {offsets = [0, 4], sizes = [2, 2], strides = [1, 1]} : vector<2x8xf32> to vector<2x2xf32>
    %485 = arith.mulf %482, %410 : vector<2x2xf32>
    %486 = arith.mulf %481, %484 : vector<2x2xf32>
    %487 = arith.addf %485, %486 : vector<2x2xf32>
    %488 = math.tanh %487 : vector<2x2xf32>
    %489 = arith.mulf %483, %488 : vector<2x2xf32>
    %490 = vector.extract_strided_slice %489 {offsets = [0, 0], sizes = [2, 1], strides = [1, 1]} : vector<2x2xf32> to vector<2x1xf32>
    %491 = vector.broadcast %490 : vector<2x1xf32> to vector<2x8xf32>
    %492 = arith.mulf %491, %20 : vector<2x8xf32>
    %493 = vector.extract_strided_slice %489 {offsets = [0, 1], sizes = [2, 1], strides = [1, 1]} : vector<2x2xf32> to vector<2x1xf32>
    %494 = vector.broadcast %493 : vector<2x1xf32> to vector<2x8xf32>
    %495 = arith.mulf %494, %23 : vector<2x8xf32>
    %496 = arith.addf %492, %495 : vector<2x8xf32>
    %cst_56 = arith.constant 0.000000e+00 : f32
    %497 = vector.broadcast %cst_56 : f32 to vector<2x2xf32>
    %498 = arith.maximumf %489, %497 : vector<2x2xf32>
    %499 = vector.extract_strided_slice %498 {offsets = [0, 0], sizes = [2, 1], strides = [1, 1]} : vector<2x2xf32> to vector<2x1xf32>
    %500 = vector.broadcast %499 : vector<2x1xf32> to vector<2x128xf32>
    %501 = arith.mulf %500, %32 : vector<2x128xf32>
    %502 = vector.extract_strided_slice %498 {offsets = [0, 1], sizes = [2, 1], strides = [1, 1]} : vector<2x2xf32> to vector<2x1xf32>
    %503 = vector.broadcast %502 : vector<2x1xf32> to vector<2x128xf32>
    %504 = arith.mulf %503, %35 : vector<2x128xf32>
    %505 = arith.addf %501, %504 : vector<2x128xf32>
    %506 = arith.addf %505, %38 : vector<2x128xf32>
    %c10_57 = arith.constant 10 : index
    %c0_58 = arith.constant 0 : index
    %507 = vector.load %arg3[%c10_57, %c0_58] : memref<16x128xf32, #tpu.memory_space<vmem>>, vector<2x128xf32>
    tpu.vector_store %arg3[%c10_57, %c0_58], %506 {strides = array<i32>} : memref<16x128xf32, #tpu.memory_space<vmem>>, vector<2x128xf32>,
    %c12_59 = arith.constant 12 : index
    %c0_60 = arith.constant 0 : index
    %508 = vector.load %arg0[%c12_59, %c0_60] : memref<16x4xf32, #tpu.memory_space<vmem>>, vector<2x4xf32>
    %509 = vector.extract_strided_slice %508 {offsets = [0, 0], sizes = [2, 1], strides = [1, 1]} : vector<2x4xf32> to vector<2x1xf32>
    %510 = vector.broadcast %509 : vector<2x1xf32> to vector<2x8xf32>
    %511 = arith.mulf %510, %2 : vector<2x8xf32>
    %512 = arith.addf %26, %511 : vector<2x8xf32>
    %513 = vector.extract_strided_slice %508 {offsets = [0, 1], sizes = [2, 1], strides = [1, 1]} : vector<2x4xf32> to vector<2x1xf32>
    %514 = vector.broadcast %513 : vector<2x1xf32> to vector<2x8xf32>
    %515 = arith.mulf %514, %5 : vector<2x8xf32>
    %516 = arith.addf %512, %515 : vector<2x8xf32>
    %517 = vector.extract_strided_slice %508 {offsets = [0, 2], sizes = [2, 1], strides = [1, 1]} : vector<2x4xf32> to vector<2x1xf32>
    %518 = vector.broadcast %517 : vector<2x1xf32> to vector<2x8xf32>
    %519 = arith.mulf %518, %8 : vector<2x8xf32>
    %520 = arith.addf %516, %519 : vector<2x8xf32>
    %521 = vector.extract_strided_slice %508 {offsets = [0, 3], sizes = [2, 1], strides = [1, 1]} : vector<2x4xf32> to vector<2x1xf32>
    %522 = vector.broadcast %521 : vector<2x1xf32> to vector<2x8xf32>
    %523 = arith.mulf %522, %11 : vector<2x8xf32>
    %524 = arith.addf %520, %523 : vector<2x8xf32>
    %525 = arith.addf %524, %474 : vector<2x8xf32>
    %526 = arith.negf %525 : vector<2x8xf32>
    %527 = math.exp %526 : vector<2x8xf32>
    %cst_61 = arith.constant 1.000000e+00 : f32
    %528 = vector.broadcast %cst_61 : f32 to vector<2x8xf32>
    %529 = arith.addf %528, %527 : vector<2x8xf32>
    %530 = arith.divf %528, %529 : vector<2x8xf32>
    %531 = math.tanh %525 : vector<2x8xf32>
    %532 = vector.extract_strided_slice %530 {offsets = [0, 0], sizes = [2, 2], strides = [1, 1]} : vector<2x8xf32> to vector<2x2xf32>
    %533 = vector.extract_strided_slice %530 {offsets = [0, 2], sizes = [2, 2], strides = [1, 1]} : vector<2x8xf32> to vector<2x2xf32>
    %534 = vector.extract_strided_slice %530 {offsets = [0, 6], sizes = [2, 2], strides = [1, 1]} : vector<2x8xf32> to vector<2x2xf32>
    %535 = vector.extract_strided_slice %531 {offsets = [0, 4], sizes = [2, 2], strides = [1, 1]} : vector<2x8xf32> to vector<2x2xf32>
    %536 = arith.mulf %533, %461 : vector<2x2xf32>
    %537 = arith.mulf %532, %535 : vector<2x2xf32>
    %538 = arith.addf %536, %537 : vector<2x2xf32>
    %539 = math.tanh %538 : vector<2x2xf32>
    %540 = arith.mulf %534, %539 : vector<2x2xf32>
    %541 = vector.extract_strided_slice %540 {offsets = [0, 0], sizes = [2, 1], strides = [1, 1]} : vector<2x2xf32> to vector<2x1xf32>
    %542 = vector.broadcast %541 : vector<2x1xf32> to vector<2x16xf32>
    %543 = arith.mulf %542, %14 : vector<2x16xf32>
    %544 = vector.extract_strided_slice %540 {offsets = [0, 1], sizes = [2, 1], strides = [1, 1]} : vector<2x2xf32> to vector<2x1xf32>
    %545 = vector.broadcast %544 : vector<2x1xf32> to vector<2x16xf32>
    %546 = arith.mulf %545, %17 : vector<2x16xf32>
    %547 = arith.addf %543, %546 : vector<2x16xf32>
    %548 = vector.extract_strided_slice %547 {offsets = [0, 0], sizes = [2, 8], strides = [1, 1]} : vector<2x16xf32> to vector<2x8xf32>
    %549 = arith.addf %548, %496 : vector<2x8xf32>
    %550 = arith.addf %549, %29 : vector<2x8xf32>
    %551 = vector.extract_strided_slice %547 {offsets = [0, 8], sizes = [2, 8], strides = [1, 1]} : vector<2x16xf32> to vector<2x8xf32>
    %552 = arith.negf %550 : vector<2x8xf32>
    %553 = math.exp %552 : vector<2x8xf32>
    %cst_62 = arith.constant 1.000000e+00 : f32
    %554 = vector.broadcast %cst_62 : f32 to vector<2x8xf32>
    %555 = arith.addf %554, %553 : vector<2x8xf32>
    %556 = arith.divf %554, %555 : vector<2x8xf32>
    %557 = math.tanh %550 : vector<2x8xf32>
    %558 = vector.extract_strided_slice %556 {offsets = [0, 0], sizes = [2, 2], strides = [1, 1]} : vector<2x8xf32> to vector<2x2xf32>
    %559 = vector.extract_strided_slice %556 {offsets = [0, 2], sizes = [2, 2], strides = [1, 1]} : vector<2x8xf32> to vector<2x2xf32>
    %560 = vector.extract_strided_slice %556 {offsets = [0, 6], sizes = [2, 2], strides = [1, 1]} : vector<2x8xf32> to vector<2x2xf32>
    %561 = vector.extract_strided_slice %557 {offsets = [0, 4], sizes = [2, 2], strides = [1, 1]} : vector<2x8xf32> to vector<2x2xf32>
    %562 = arith.mulf %559, %487 : vector<2x2xf32>
    %563 = arith.mulf %558, %561 : vector<2x2xf32>
    %564 = arith.addf %562, %563 : vector<2x2xf32>
    %565 = math.tanh %564 : vector<2x2xf32>
    %566 = arith.mulf %560, %565 : vector<2x2xf32>
    %567 = vector.extract_strided_slice %566 {offsets = [0, 0], sizes = [2, 1], strides = [1, 1]} : vector<2x2xf32> to vector<2x1xf32>
    %568 = vector.broadcast %567 : vector<2x1xf32> to vector<2x8xf32>
    %569 = arith.mulf %568, %20 : vector<2x8xf32>
    %570 = vector.extract_strided_slice %566 {offsets = [0, 1], sizes = [2, 1], strides = [1, 1]} : vector<2x2xf32> to vector<2x1xf32>
    %571 = vector.broadcast %570 : vector<2x1xf32> to vector<2x8xf32>
    %572 = arith.mulf %571, %23 : vector<2x8xf32>
    %573 = arith.addf %569, %572 : vector<2x8xf32>
    %cst_63 = arith.constant 0.000000e+00 : f32
    %574 = vector.broadcast %cst_63 : f32 to vector<2x2xf32>
    %575 = arith.maximumf %566, %574 : vector<2x2xf32>
    %576 = vector.extract_strided_slice %575 {offsets = [0, 0], sizes = [2, 1], strides = [1, 1]} : vector<2x2xf32> to vector<2x1xf32>
    %577 = vector.broadcast %576 : vector<2x1xf32> to vector<2x128xf32>
    %578 = arith.mulf %577, %32 : vector<2x128xf32>
    %579 = vector.extract_strided_slice %575 {offsets = [0, 1], sizes = [2, 1], strides = [1, 1]} : vector<2x2xf32> to vector<2x1xf32>
    %580 = vector.broadcast %579 : vector<2x1xf32> to vector<2x128xf32>
    %581 = arith.mulf %580, %35 : vector<2x128xf32>
    %582 = arith.addf %578, %581 : vector<2x128xf32>
    %583 = arith.addf %582, %38 : vector<2x128xf32>
    %c12_64 = arith.constant 12 : index
    %c0_65 = arith.constant 0 : index
    %584 = vector.load %arg3[%c12_64, %c0_65] : memref<16x128xf32, #tpu.memory_space<vmem>>, vector<2x128xf32>
    tpu.vector_store %arg3[%c12_64, %c0_65], %583 {strides = array<i32>} : memref<16x128xf32, #tpu.memory_space<vmem>>, vector<2x128xf32>,
    %c14_66 = arith.constant 14 : index
    %c0_67 = arith.constant 0 : index
    %585 = vector.load %arg0[%c14_66, %c0_67] : memref<16x4xf32, #tpu.memory_space<vmem>>, vector<2x4xf32>
    %586 = vector.extract_strided_slice %585 {offsets = [0, 0], sizes = [2, 1], strides = [1, 1]} : vector<2x4xf32> to vector<2x1xf32>
    %587 = vector.broadcast %586 : vector<2x1xf32> to vector<2x8xf32>
    %588 = arith.mulf %587, %2 : vector<2x8xf32>
    %589 = arith.addf %26, %588 : vector<2x8xf32>
    %590 = vector.extract_strided_slice %585 {offsets = [0, 1], sizes = [2, 1], strides = [1, 1]} : vector<2x4xf32> to vector<2x1xf32>
    %591 = vector.broadcast %590 : vector<2x1xf32> to vector<2x8xf32>
    %592 = arith.mulf %591, %5 : vector<2x8xf32>
    %593 = arith.addf %589, %592 : vector<2x8xf32>
    %594 = vector.extract_strided_slice %585 {offsets = [0, 2], sizes = [2, 1], strides = [1, 1]} : vector<2x4xf32> to vector<2x1xf32>
    %595 = vector.broadcast %594 : vector<2x1xf32> to vector<2x8xf32>
    %596 = arith.mulf %595, %8 : vector<2x8xf32>
    %597 = arith.addf %593, %596 : vector<2x8xf32>
    %598 = vector.extract_strided_slice %585 {offsets = [0, 3], sizes = [2, 1], strides = [1, 1]} : vector<2x4xf32> to vector<2x1xf32>
    %599 = vector.broadcast %598 : vector<2x1xf32> to vector<2x8xf32>
    %600 = arith.mulf %599, %11 : vector<2x8xf32>
    %601 = arith.addf %597, %600 : vector<2x8xf32>
    %602 = arith.addf %601, %551 : vector<2x8xf32>
    %603 = arith.negf %602 : vector<2x8xf32>
    %604 = math.exp %603 : vector<2x8xf32>
    %cst_68 = arith.constant 1.000000e+00 : f32
    %605 = vector.broadcast %cst_68 : f32 to vector<2x8xf32>
    %606 = arith.addf %605, %604 : vector<2x8xf32>
    %607 = arith.divf %605, %606 : vector<2x8xf32>
    %608 = math.tanh %602 : vector<2x8xf32>
    %609 = vector.extract_strided_slice %607 {offsets = [0, 0], sizes = [2, 2], strides = [1, 1]} : vector<2x8xf32> to vector<2x2xf32>
    %610 = vector.extract_strided_slice %607 {offsets = [0, 2], sizes = [2, 2], strides = [1, 1]} : vector<2x8xf32> to vector<2x2xf32>
    %611 = vector.extract_strided_slice %607 {offsets = [0, 6], sizes = [2, 2], strides = [1, 1]} : vector<2x8xf32> to vector<2x2xf32>
    %612 = vector.extract_strided_slice %608 {offsets = [0, 4], sizes = [2, 2], strides = [1, 1]} : vector<2x8xf32> to vector<2x2xf32>
    %613 = arith.mulf %610, %538 : vector<2x2xf32>
    %614 = arith.mulf %609, %612 : vector<2x2xf32>
    %615 = arith.addf %613, %614 : vector<2x2xf32>
    %616 = math.tanh %615 : vector<2x2xf32>
    %617 = arith.mulf %611, %616 : vector<2x2xf32>
    %618 = vector.extract_strided_slice %617 {offsets = [0, 0], sizes = [2, 1], strides = [1, 1]} : vector<2x2xf32> to vector<2x1xf32>
    %619 = vector.broadcast %618 : vector<2x1xf32> to vector<2x16xf32>
    %620 = arith.mulf %619, %14 : vector<2x16xf32>
    %621 = vector.extract_strided_slice %617 {offsets = [0, 1], sizes = [2, 1], strides = [1, 1]} : vector<2x2xf32> to vector<2x1xf32>
    %622 = vector.broadcast %621 : vector<2x1xf32> to vector<2x16xf32>
    %623 = arith.mulf %622, %17 : vector<2x16xf32>
    %624 = arith.addf %620, %623 : vector<2x16xf32>
    %625 = vector.extract_strided_slice %624 {offsets = [0, 0], sizes = [2, 8], strides = [1, 1]} : vector<2x16xf32> to vector<2x8xf32>
    %626 = arith.addf %625, %573 : vector<2x8xf32>
    %627 = arith.addf %626, %29 : vector<2x8xf32>
    %628 = arith.negf %627 : vector<2x8xf32>
    %629 = math.exp %628 : vector<2x8xf32>
    %cst_69 = arith.constant 1.000000e+00 : f32
    %630 = vector.broadcast %cst_69 : f32 to vector<2x8xf32>
    %631 = arith.addf %630, %629 : vector<2x8xf32>
    %632 = arith.divf %630, %631 : vector<2x8xf32>
    %633 = math.tanh %627 : vector<2x8xf32>
    %634 = vector.extract_strided_slice %632 {offsets = [0, 0], sizes = [2, 2], strides = [1, 1]} : vector<2x8xf32> to vector<2x2xf32>
    %635 = vector.extract_strided_slice %632 {offsets = [0, 2], sizes = [2, 2], strides = [1, 1]} : vector<2x8xf32> to vector<2x2xf32>
    %636 = vector.extract_strided_slice %632 {offsets = [0, 6], sizes = [2, 2], strides = [1, 1]} : vector<2x8xf32> to vector<2x2xf32>
    %637 = vector.extract_strided_slice %633 {offsets = [0, 4], sizes = [2, 2], strides = [1, 1]} : vector<2x8xf32> to vector<2x2xf32>
    %638 = arith.mulf %635, %564 : vector<2x2xf32>
    %639 = arith.mulf %634, %637 : vector<2x2xf32>
    %640 = arith.addf %638, %639 : vector<2x2xf32>
    %641 = math.tanh %640 : vector<2x2xf32>
    %642 = arith.mulf %636, %641 : vector<2x2xf32>
    %cst_70 = arith.constant 0.000000e+00 : f32
    %643 = vector.broadcast %cst_70 : f32 to vector<2x2xf32>
    %644 = arith.maximumf %642, %643 : vector<2x2xf32>
    %645 = vector.extract_strided_slice %644 {offsets = [0, 0], sizes = [2, 1], strides = [1, 1]} : vector<2x2xf32> to vector<2x1xf32>
    %646 = vector.broadcast %645 : vector<2x1xf32> to vector<2x128xf32>
    %647 = arith.mulf %646, %32 : vector<2x128xf32>
    %648 = vector.extract_strided_slice %644 {offsets = [0, 1], sizes = [2, 1], strides = [1, 1]} : vector<2x2xf32> to vector<2x1xf32>
    %649 = vector.broadcast %648 : vector<2x1xf32> to vector<2x128xf32>
    %650 = arith.mulf %649, %35 : vector<2x128xf32>
    %651 = arith.addf %647, %650 : vector<2x128xf32>
    %652 = arith.addf %651, %38 : vector<2x128xf32>
    %c14_71 = arith.constant 14 : index
    %c0_72 = arith.constant 0 : index
    %653 = vector.load %arg3[%c14_71, %c0_72] : memref<16x128xf32, #tpu.memory_space<vmem>>, vector<2x128xf32>
    tpu.vector_store %arg3[%c14_71, %c0_72], %652 {strides = array<i32>} : memref<16x128xf32, #tpu.memory_space<vmem>>, vector<2x128xf32>,
    %c0_73 = arith.constant 0 : index
    %c0_74 = arith.constant 0 : index
    %654 = vector.load %arg3[%c0_73, %c0_74] : memref<16x128xf32, #tpu.memory_space<vmem>>, vector<16x128xf32>
    %cst_75 = arith.constant 0.000000e+00 : f32
    %655 = vector.broadcast %cst_75 : f32 to vector<16x128xf32>
    %656 = arith.maximumf %654, %655 : vector<16x128xf32>
    %657 = arith.mulf %656, %41 : vector<16x128xf32>
    %cst_76 = arith.constant dense<0.000000e+00> : vector<16xf32>
    %658 = vector.multi_reduction <add>, %657, %cst_76 [1] : vector<16x128xf32> to vector<16xf32>
    %659 = vector.shape_cast %658 : vector<16xf32> to vector<16x1xf32>
    %660 = vector.broadcast %42 : vector<1x1xf32> to vector<16x1xf32>
    %661 = arith.addf %659, %660 : vector<16x1xf32>
    %c0_77 = arith.constant 0 : index
    %c0_78 = arith.constant 0 : index
    %662 = vector.load %arg2[%c0_77, %c0_78] : memref<16x1xf32, #tpu.memory_space<vmem>>, vector<16x1xf32>
    tpu.vector_store %arg2[%c0_77, %c0_78], %661 {strides = array<i32>} : memref<16x1xf32, #tpu.memory_space<vmem>>, vector<16x1xf32>,
    return
  }
}

</mosaic_0001>

<llo_original>
// kernel: lstm1_forward.1
$region0: #{lstm1_forward.1}
  #allocation0 [shape = 'u32[]', space=smem, size = 0x4, offset = 0x4, fixed_abs, tag = 'smem constant byte address 0x4 - core index']
  #allocation1 [shape = 'u32[72,128]{1,0:T(1,128)}', space=vmem, size = 0x9000, scoped, tag = 'internal scratch']
  #allocation2 [shape = 'f32[16,128]{1,0:T(8,128)}', space=vmem, size = 0x2000, scoped, tag = 'scratch operand']
  %s0 = inlined_call_operand.vmem [shape: f32[16,4], index: 0, kind: input, shape index: {}]
  %s1 = inlined_call_operand.vmem [shape: f32[16,128], index: 1, kind: input, shape index: {}]
  %s2 = inlined_call_operand.vmem [shape: f32[16,1], index: 2, kind: output, shape index: {}]
  %s3 = sld [smem:[#allocation0]]
  $region18: #{lstm1_forward.1} parent=0
    _
  %s5 = ssub.s32 1, %s3
  %s6 = scalar_select 0, %s5, %s3
  // Predicated region
  $region2: #{lstm1_forward.1} parent=0 // pred_check
    _
  $region3: #{lstm1_forward.1} parent=0 // pred_check_branch
    %8 = sbr.rel (0) target = $region5
  $region4: #{lstm1_forward.1} parent=0 // pred_region
    _
  $region5: #{lstm1_forward.1} parent=0 // pred_fallthru
    _
  // Predicated region
  $region6: #{lstm1_forward.1} parent=0 // pred_check
    _
  $region7: #{lstm1_forward.1} parent=0 // pred_check_branch
    %10 = sbr.rel (0) target = $region9
  $region8: #{lstm1_forward.1} parent=0 // pred_region
    _
  $region9: #{lstm1_forward.1} parent=0 // pred_fallthru
    _
  %v11 = vld [vmem:[%s1] sm:$0x1]
  %v12 = vperm.slane %v11, 0
  %v13 = vld [vmem:[%s1 + $0x1] sm:$0x1]
  %v14 = vperm.slane %v13, 0
  %v15 = vld [vmem:[%s1 + $0x2] sm:$0x1]
  %v16 = vperm.slane %v15, 0
  %v17 = vld [vmem:[%s1 + $0x3] sm:$0x1]
  %v18 = vperm.slane %v17, 0
  %v19 = vld [vmem:[%s1 + $0x4] sm:$0x1]
  %v20 = vperm.slane %v19, 0
  %v21 = vld [vmem:[%s1 + $0x5] sm:$0x1]
  %v22 = vperm.slane %v21, 0
  %v23 = vld [vmem:[%s1 + $0x6] sm:$0x1]
  %v24 = vperm.slane %v23, 0
  %v25 = vld [vmem:[%s1 + $0x7] sm:$0x1]
  %v26 = vperm.slane %v25, 0
  %v27 = vld [vmem:[%s1 + $0x8] sm:$0x1]
  %v28 = vperm.slane %v27, 0
  %v29 = vld [vmem:[%s1 + $0x9] sm:$0x1]
  %v30 = vperm.slane %v29, 0
  %v31 = vld [vmem:[%s1 + $0xa] sm:$0x1]
  %v32 = vperm.slane %v31, 0
  %v33 = vld [vmem:[%s1 + $0xb] sm:$0x1]
  %v34 = vperm.slane %v33, 0
  %v35 = vld [vmem:[%s1 + $0xc] sm:$0x1]
  %v36 = vperm.slane %v35, 0
  %v37 = vld [vmem:[%s1 + $0xd] sm:$0x1]
  %v38 = vperm.slane %v37, 0
  %v39 = vld [vmem:[%s1 + $0xe] sm:$0x1]
  %v40 = vld [vmem:[%s0] sm:$0x3]
  %42 = vset.pattern.permute.xlu0 0
  %43 = vperm.xlu0 %42, %v40
  %v44 = vpop.permute.xlu0 %43
  %v46 = vmul.f32 %v44, %v12
  %v47 = vadd.f32 %v28, %v46
  %48 = vset.pattern.permute.xlu0 1
  %49 = vperm.xlu0 %48, %v40
  %v50 = vpop.permute.xlu0 %49
  %v52 = vmul.f32 %v50, %v14
  %v53 = vadd.f32 %v47, %v52
  %54 = vset.pattern.permute.xlu0 2
  %55 = vperm.xlu0 %54, %v40
  %v56 = vpop.permute.xlu0 %55
  %v58 = vmul.f32 %v56, %v16
  %v59 = vadd.f32 %v53, %v58
  %60 = vset.pattern.permute.xlu0 3
  %61 = vperm.xlu0 %60, %v40
  %v62 = vpop.permute.xlu0 %61
  %v64 = vmul.f32 %v62, %v18
  %v65 = vadd.f32 %v59, %v64
  %v66 = vadd.f32 %v65, 0.0
  %v67 = vxor.u32 %v66, 2147483648
  %v68 = vmul.f32 %v67, 1.442695
  %v69 = vpow.pop %v68
  %v70 = vadd.f32 %v69, 1.0
  %v71 = vrcp.pop %v70
  %v72 = vmul.f32 %v70, %v71
  %v73 = vsub.f32 1.0, %v72
  %v74 = vmul.f32 %v71, %v73
  %v75 = vadd.f32 %v71, %v74
  %vm76 = vweird.f32 %v70
  %vm77 = vweird.f32 %v71
  %vm78 = vmor %vm76, %vm77
  %v79 = vsel %vm78, %v71, %v75
  %v80 = vand.u32 2147483647, %v70
  %vm81 = vcmp.eq.f32.partialorder %v80, 8.507059e+37
  %v82 = vand.u32 %v70, 2147483648
  %v83 = vor.u32 1.1754944e-38, %v82
  %v84 = vsel %vm81, %v83, %v79
  %v85 = vmul.f32 1.0, %v84
  %v86 = vtanh.pop %v66
  %v87 = vmul.f32 %v85, 0.0
  %89 = vrot.lane.b32.xlu0 %v86, 124
  %v90 = vpop.permute.xlu0 %89
  %v92 = vmul.f32 %v85, %v90
  %94 = vrot.lane.b32.xlu0 %v92, 2
  %v95 = vpop.permute.xlu0 %94
  %v97 = vadd.f32 %v87, %v95
  %v98 = vtanh.pop %v97
  %100 = vrot.lane.b32.xlu0 %v98, 4
  %v101 = vpop.permute.xlu0 %100
  %v103 = vmul.f32 %v85, %v101
  %105 = vset.pattern.permute.xlu0 6
  %106 = vperm.xlu0 %105, %v103
  %v107 = vpop.permute.xlu0 %106
  %v109 = vmul.f32 %v107, %v20
  %110 = vset.pattern.permute.xlu0 7
  %111 = vperm.xlu0 %110, %v103
  %v112 = vpop.permute.xlu0 %111
  %v114 = vmul.f32 %v112, %v22
  %v115 = vadd.f32 %v109, %v114
  %v116 = vadd.f32 %v115, 0.0
  %v117 = vadd.f32 %v116, %v30
  %v118 = vxor.u32 %v117, 2147483648
  %v119 = vmul.f32 %v118, 1.442695
  %v120 = vpow.pop %v119
  %v121 = vadd.f32 %v120, 1.0
  %v122 = vrcp.pop %v121
  %v123 = vmul.f32 %v121, %v122
  %v124 = vsub.f32 1.0, %v123
  %v125 = vmul.f32 %v122, %v124
  %v126 = vadd.f32 %v122, %v125
  %vm127 = vweird.f32 %v121
  %vm128 = vweird.f32 %v122
  %vm129 = vmor %vm127, %vm128
  %v130 = vsel %vm129, %v122, %v126
  %v131 = vand.u32 2147483647, %v121
  %vm132 = vcmp.eq.f32.partialorder %v131, 8.507059e+37
  %v133 = vand.u32 %v121, 2147483648
  %v134 = vor.u32 1.1754944e-38, %v133
  %v135 = vsel %vm132, %v134, %v130
  %v136 = vmul.f32 1.0, %v135
  %v137 = vtanh.pop %v117
  %v138 = vmul.f32 %v136, 0.0
  %140 = vrot.lane.b32.xlu0 %v137, 124
  %v141 = vpop.permute.xlu0 %140
  %v143 = vmul.f32 %v136, %v141
  %145 = vrot.lane.b32.xlu0 %v143, 2
  %v146 = vpop.permute.xlu0 %145
  %v148 = vadd.f32 %v138, %v146
  %v149 = vtanh.pop %v148
  %151 = vrot.lane.b32.xlu0 %v149, 4
  %v152 = vpop.permute.xlu0 %151
  %v154 = vmul.f32 %v136, %v152
  %156 = vset.pattern.permute.xlu0 6
  %157 = vperm.xlu0 %156, %v154
  %v158 = vpop.permute.xlu0 %157
  %v160 = vmul.f32 %v158, %v24
  %161 = vset.pattern.permute.xlu0 7
  %162 = vperm.xlu0 %161, %v154
  %v163 = vpop.permute.xlu0 %162
  %v165 = vmul.f32 %v163, %v26
  %v166 = vadd.f32 %v160, %v165
  %v167 = vmax.f32 %v154, 0.0
  %169 = vset.pattern.permute.xlu0 6
  %170 = vperm.xlu0 %169, %v167
  %v171 = vpop.permute.xlu0 %170
  %v173 = vmul.f32 %v171, %v32
  %174 = vset.pattern.permute.xlu0 7
  %175 = vperm.xlu0 %174, %v167
  %v176 = vpop.permute.xlu0 %175
  %v178 = vmul.f32 %v176, %v34
  %v179 = vadd.f32 %v173, %v178
  %v180 = vadd.f32 %v179, %v36
  %181 = vst [vmem:[#allocation2] sm:$0x3] %v180
  %v182 = vld [vmem:[%s0 + $0x2] sm:$0x3]
  %184 = vset.pattern.permute.xlu0 0
  %185 = vperm.xlu0 %184, %v182
  %v186 = vpop.permute.xlu0 %185
  %v188 = vmul.f32 %v186, %v12
  %v189 = vadd.f32 %v28, %v188
  %190 = vset.pattern.permute.xlu0 1
  %191 = vperm.xlu0 %190, %v182
  %v192 = vpop.permute.xlu0 %191
  %v194 = vmul.f32 %v192, %v14
  %v195 = vadd.f32 %v189, %v194
  %196 = vset.pattern.permute.xlu0 2
  %197 = vperm.xlu0 %196, %v182
  %v198 = vpop.permute.xlu0 %197
  %v200 = vmul.f32 %v198, %v16
  %v201 = vadd.f32 %v195, %v200
  %202 = vset.pattern.permute.xlu0 3
  %203 = vperm.xlu0 %202, %v182
  %v204 = vpop.permute.xlu0 %203
  %v206 = vmul.f32 %v204, %v18
  %v207 = vadd.f32 %v201, %v206
  %209 = vrot.lane.b32.xlu0 %v115, 120
  %v210 = vpop.permute.xlu0 %209
  %v212 = vadd.f32 %v207, %v210
  %v213 = vxor.u32 %v212, 2147483648
  %v214 = vmul.f32 %v213, 1.442695
  %v215 = vpow.pop %v214
  %v216 = vadd.f32 %v215, 1.0
  %v217 = vrcp.pop %v216
  %v218 = vmul.f32 %v216, %v217
  %v219 = vsub.f32 1.0, %v218
  %v220 = vmul.f32 %v217, %v219
  %v221 = vadd.f32 %v217, %v220
  %vm222 = vweird.f32 %v216
  %vm223 = vweird.f32 %v217
  %vm224 = vmor %vm222, %vm223
  %v225 = vsel %vm224, %v217, %v221
  %v226 = vand.u32 2147483647, %v216
  %vm227 = vcmp.eq.f32.partialorder %v226, 8.507059e+37
  %v228 = vand.u32 %v216, 2147483648
  %v229 = vor.u32 1.1754944e-38, %v228
  %v230 = vsel %vm227, %v229, %v225
  %v231 = vmul.f32 1.0, %v230
  %v232 = vtanh.pop %v212
  %v233 = vmul.f32 %v231, %v97
  %235 = vrot.lane.b32.xlu0 %v232, 124
  %v236 = vpop.permute.xlu0 %235
  %v238 = vmul.f32 %v231, %v236
  %240 = vrot.lane.b32.xlu0 %v238, 2
  %v241 = vpop.permute.xlu0 %240
  %v243 = vadd.f32 %v233, %v241
  %v244 = vtanh.pop %v243
  %246 = vrot.lane.b32.xlu0 %v244, 4
  %v247 = vpop.permute.xlu0 %246
  %v249 = vmul.f32 %v231, %v247
  %251 = vset.pattern.permute.xlu0 6
  %252 = vperm.xlu0 %251, %v249
  %v253 = vpop.permute.xlu0 %252
  %v255 = vmul.f32 %v253, %v20
  %256 = vset.pattern.permute.xlu0 7
  %257 = vperm.xlu0 %256, %v249
  %v258 = vpop.permute.xlu0 %257
  %v260 = vmul.f32 %v258, %v22
  %v261 = vadd.f32 %v255, %v260
  %v262 = vadd.f32 %v261, %v166
  %v263 = vadd.f32 %v262, %v30
  %v264 = vxor.u32 %v263, 2147483648
  %v265 = vmul.f32 %v264, 1.442695
  %v266 = vpow.pop %v265
  %v267 = vadd.f32 %v266, 1.0
  %v268 = vrcp.pop %v267
  %v269 = vmul.f32 %v267, %v268
  %v270 = vsub.f32 1.0, %v269
  %v271 = vmul.f32 %v268, %v270
  %v272 = vadd.f32 %v268, %v271
  %vm273 = vweird.f32 %v267
  %vm274 = vweird.f32 %v268
  %vm275 = vmor %vm273, %vm274
  %v276 = vsel %vm275, %v268, %v272
  %v277 = vand.u32 2147483647, %v267
  %vm278 = vcmp.eq.f32.partialorder %v277, 8.507059e+37
  %v279 = vand.u32 %v267, 2147483648
  %v280 = vor.u32 1.1754944e-38, %v279
  %v281 = vsel %vm278, %v280, %v276
  %v282 = vmul.f32 1.0, %v281
  %v283 = vtanh.pop %v263
  %v284 = vmul.f32 %v282, %v148
  %286 = vrot.lane.b32.xlu0 %v283, 124
  %v287 = vpop.permute.xlu0 %286
  %v289 = vmul.f32 %v282, %v287
  %291 = vrot.lane.b32.xlu0 %v289, 2
  %v292 = vpop.permute.xlu0 %291
  %v294 = vadd.f32 %v284, %v292
  %v295 = vtanh.pop %v294
  %297 = vrot.lane.b32.xlu0 %v295, 4
  %v298 = vpop.permute.xlu0 %297
  %v300 = vmul.f32 %v282, %v298
  %302 = vset.pattern.permute.xlu0 6
  %303 = vperm.xlu0 %302, %v300
  %v304 = vpop.permute.xlu0 %303
  %v306 = vmul.f32 %v304, %v24
  %307 = vset.pattern.permute.xlu0 7
  %308 = vperm.xlu0 %307, %v300
  %v309 = vpop.permute.xlu0 %308
  %v311 = vmul.f32 %v309, %v26
  %v312 = vadd.f32 %v306, %v311
  %v313 = vmax.f32 %v300, 0.0
  %315 = vset.pattern.permute.xlu0 6
  %316 = vperm.xlu0 %315, %v313
  %v317 = vpop.permute.xlu0 %316
  %v319 = vmul.f32 %v317, %v32
  %320 = vset.pattern.permute.xlu0 7
  %321 = vperm.xlu0 %320, %v313
  %v322 = vpop.permute.xlu0 %321
  %v324 = vmul.f32 %v322, %v34
  %v325 = vadd.f32 %v319, %v324
  %v326 = vadd.f32 %v325, %v36
  %327 = vst [vmem:[#allocation2 + $0x2] sm:$0x3] %v326
  %v328 = vld [vmem:[%s0 + $0x4] sm:$0x3]
  %330 = vset.pattern.permute.xlu0 0
  %331 = vperm.xlu0 %330, %v328
  %v332 = vpop.permute.xlu0 %331
  %v334 = vmul.f32 %v332, %v12
  %v335 = vadd.f32 %v28, %v334
  %336 = vset.pattern.permute.xlu0 1
  %337 = vperm.xlu0 %336, %v328
  %v338 = vpop.permute.xlu0 %337
  %v340 = vmul.f32 %v338, %v14
  %v341 = vadd.f32 %v335, %v340
  %342 = vset.pattern.permute.xlu0 2
  %343 = vperm.xlu0 %342, %v328
  %v344 = vpop.permute.xlu0 %343
  %v346 = vmul.f32 %v344, %v16
  %v347 = vadd.f32 %v341, %v346
  %348 = vset.pattern.permute.xlu0 3
  %349 = vperm.xlu0 %348, %v328
  %v350 = vpop.permute.xlu0 %349
  %v352 = vmul.f32 %v350, %v18
  %v353 = vadd.f32 %v347, %v352
  %355 = vrot.lane.b32.xlu0 %v261, 120
  %v356 = vpop.permute.xlu0 %355
  %v358 = vadd.f32 %v353, %v356
  %v359 = vxor.u32 %v358, 2147483648
  %v360 = vmul.f32 %v359, 1.442695
  %v361 = vpow.pop %v360
  %v362 = vadd.f32 %v361, 1.0
  %v363 = vrcp.pop %v362
  %v364 = vmul.f32 %v362, %v363
  %v365 = vsub.f32 1.0, %v364
  %v366 = vmul.f32 %v363, %v365
  %v367 = vadd.f32 %v363, %v366
  %vm368 = vweird.f32 %v362
  %vm369 = vweird.f32 %v363
  %vm370 = vmor %vm368, %vm369
  %v371 = vsel %vm370, %v363, %v367
  %v372 = vand.u32 2147483647, %v362
  %vm373 = vcmp.eq.f32.partialorder %v372, 8.507059e+37
  %v374 = vand.u32 %v362, 2147483648
  %v375 = vor.u32 1.1754944e-38, %v374
  %v376 = vsel %vm373, %v375, %v371
  %v377 = vmul.f32 1.0, %v376
  %v378 = vtanh.pop %v358
  %v379 = vmul.f32 %v377, %v243
  %381 = vrot.lane.b32.xlu0 %v378, 124
  %v382 = vpop.permute.xlu0 %381
  %v384 = vmul.f32 %v377, %v382
  %386 = vrot.lane.b32.xlu0 %v384, 2
  %v387 = vpop.permute.xlu0 %386
  %v389 = vadd.f32 %v379, %v387
  %v390 = vtanh.pop %v389
  %392 = vrot.lane.b32.xlu0 %v390, 4
  %v393 = vpop.permute.xlu0 %392
  %v395 = vmul.f32 %v377, %v393
  %397 = vset.pattern.permute.xlu0 6
  %398 = vperm.xlu0 %397, %v395
  %v399 = vpop.permute.xlu0 %398
  %v401 = vmul.f32 %v399, %v20
  %402 = vset.pattern.permute.xlu0 7
  %403 = vperm.xlu0 %402, %v395
  %v404 = vpop.permute.xlu0 %403
  %v406 = vmul.f32 %v404, %v22
  %v407 = vadd.f32 %v401, %v406
  %v408 = vadd.f32 %v407, %v312
  %v409 = vadd.f32 %v408, %v30
  %v410 = vxor.u32 %v409, 2147483648
  %v411 = vmul.f32 %v410, 1.442695
  %v412 = vpow.pop %v411
  %v413 = vadd.f32 %v412, 1.0
  %v414 = vrcp.pop %v413
  %v415 = vmul.f32 %v413, %v414
  %v416 = vsub.f32 1.0, %v415
  %v417 = vmul.f32 %v414, %v416
  %v418 = vadd.f32 %v414, %v417
  %vm419 = vweird.f32 %v413
  %vm420 = vweird.f32 %v414
  %vm421 = vmor %vm419, %vm420
  %v422 = vsel %vm421, %v414, %v418
  %v423 = vand.u32 2147483647, %v413
  %vm424 = vcmp.eq.f32.partialorder %v423, 8.507059e+37
  %v425 = vand.u32 %v413, 2147483648
  %v426 = vor.u32 1.1754944e-38, %v425
  %v427 = vsel %vm424, %v426, %v422
  %v428 = vmul.f32 1.0, %v427
  %v429 = vtanh.pop %v409
  %v430 = vmul.f32 %v428, %v294
  %432 = vrot.lane.b32.xlu0 %v429, 124
  %v433 = vpop.permute.xlu0 %432
  %v435 = vmul.f32 %v428, %v433
  %437 = vrot.lane.b32.xlu0 %v435, 2
  %v438 = vpop.permute.xlu0 %437
  %v440 = vadd.f32 %v430, %v438
  %v441 = vtanh.pop %v440
  %443 = vrot.lane.b32.xlu0 %v441, 4
  %v444 = vpop.permute.xlu0 %443
  %v446 = vmul.f32 %v428, %v444
  %448 = vset.pattern.permute.xlu0 6
  %449 = vperm.xlu0 %448, %v446
  %v450 = vpop.permute.xlu0 %449
  %v452 = vmul.f32 %v450, %v24
  %453 = vset.pattern.permute.xlu0 7
  %454 = vperm.xlu0 %453, %v446
  %v455 = vpop.permute.xlu0 %454
  %v457 = vmul.f32 %v455, %v26
  %v458 = vadd.f32 %v452, %v457
  %v459 = vmax.f32 %v446, 0.0
  %461 = vset.pattern.permute.xlu0 6
  %462 = vperm.xlu0 %461, %v459
  %v463 = vpop.permute.xlu0 %462
  %v465 = vmul.f32 %v463, %v32
  %466 = vset.pattern.permute.xlu0 7
  %467 = vperm.xlu0 %466, %v459
  %v468 = vpop.permute.xlu0 %467
  %v470 = vmul.f32 %v468, %v34
  %v471 = vadd.f32 %v465, %v470
  %v472 = vadd.f32 %v471, %v36
  %473 = vst [vmem:[#allocation2 + $0x4] sm:$0x3] %v472
  %v474 = vld [vmem:[%s0 + $0x6] sm:$0x3]
  %476 = vset.pattern.permute.xlu0 0
  %477 = vperm.xlu0 %476, %v474
  %v478 = vpop.permute.xlu0 %477
  %v480 = vmul.f32 %v478, %v12
  %v481 = vadd.f32 %v28, %v480
  %482 = vset.pattern.permute.xlu0 1
  %483 = vperm.xlu0 %482, %v474
  %v484 = vpop.permute.xlu0 %483
  %v486 = vmul.f32 %v484, %v14
  %v487 = vadd.f32 %v481, %v486
  %488 = vset.pattern.permute.xlu0 2
  %489 = vperm.xlu0 %488, %v474
  %v490 = vpop.permute.xlu0 %489
  %v492 = vmul.f32 %v490, %v16
  %v493 = vadd.f32 %v487, %v492
  %494 = vset.pattern.permute.xlu0 3
  %495 = vperm.xlu0 %494, %v474
  %v496 = vpop.permute.xlu0 %495
  %v498 = vmul.f32 %v496, %v18
  %v499 = vadd.f32 %v493, %v498
  %501 = vrot.lane.b32.xlu0 %v407, 120
  %v502 = vpop.permute.xlu0 %501
  %v504 = vadd.f32 %v499, %v502
  %v505 = vxor.u32 %v504, 2147483648
  %v506 = vmul.f32 %v505, 1.442695
  %v507 = vpow.pop %v506
  %v508 = vadd.f32 %v507, 1.0
  %v509 = vrcp.pop %v508
  %v510 = vmul.f32 %v508, %v509
  %v511 = vsub.f32 1.0, %v510
  %v512 = vmul.f32 %v509, %v511
  %v513 = vadd.f32 %v509, %v512
  %vm514 = vweird.f32 %v508
  %vm515 = vweird.f32 %v509
  %vm516 = vmor %vm514, %vm515
  %v517 = vsel %vm516, %v509, %v513
  %v518 = vand.u32 2147483647, %v508
  %vm519 = vcmp.eq.f32.partialorder %v518, 8.507059e+37
  %v520 = vand.u32 %v508, 2147483648
  %v521 = vor.u32 1.1754944e-38, %v520
  %v522 = vsel %vm519, %v521, %v517
  %v523 = vmul.f32 1.0, %v522
  %v524 = vtanh.pop %v504
  %v525 = vmul.f32 %v523, %v389
  %527 = vrot.lane.b32.xlu0 %v524, 124
  %v528 = vpop.permute.xlu0 %527
  %v530 = vmul.f32 %v523, %v528
  %532 = vrot.lane.b32.xlu0 %v530, 2
  %v533 = vpop.permute.xlu0 %532
  %v535 = vadd.f32 %v525, %v533
  %v536 = vtanh.pop %v535
  %538 = vrot.lane.b32.xlu0 %v536, 4
  %v539 = vpop.permute.xlu0 %538
  %v541 = vmul.f32 %v523, %v539
  %543 = vset.pattern.permute.xlu0 6
  %544 = vperm.xlu0 %543, %v541
  %v545 = vpop.permute.xlu0 %544
  %v547 = vmul.f32 %v545, %v20
  %548 = vset.pattern.permute.xlu0 7
  %549 = vperm.xlu0 %548, %v541
  %v550 = vpop.permute.xlu0 %549
  %v552 = vmul.f32 %v550, %v22
  %v553 = vadd.f32 %v547, %v552
  %v554 = vadd.f32 %v553, %v458
  %v555 = vadd.f32 %v554, %v30
  %v556 = vxor.u32 %v555, 2147483648
  %v557 = vmul.f32 %v556, 1.442695
  %v558 = vpow.pop %v557
  %v559 = vadd.f32 %v558, 1.0
  %v560 = vrcp.pop %v559
  %v561 = vmul.f32 %v559, %v560
  %v562 = vsub.f32 1.0, %v561
  %v563 = vmul.f32 %v560, %v562
  %v564 = vadd.f32 %v560, %v563
  %vm565 = vweird.f32 %v559
  %vm566 = vweird.f32 %v560
  %vm567 = vmor %vm565, %vm566
  %v568 = vsel %vm567, %v560, %v564
  %v569 = vand.u32 2147483647, %v559
  %vm570 = vcmp.eq.f32.partialorder %v569, 8.507059e+37
  %v571 = vand.u32 %v559, 2147483648
  %v572 = vor.u32 1.1754944e-38, %v571
  %v573 = vsel %vm570, %v572, %v568
  %v574 = vmul.f32 1.0, %v573
  %v575 = vtanh.pop %v555
  %v576 = vmul.f32 %v574, %v440
  %578 = vrot.lane.b32.xlu0 %v575, 124
  %v579 = vpop.permute.xlu0 %578
  %v581 = vmul.f32 %v574, %v579
  %583 = vrot.lane.b32.xlu0 %v581, 2
  %v584 = vpop.permute.xlu0 %583
  %v586 = vadd.f32 %v576, %v584
  %v587 = vtanh.pop %v586
  %589 = vrot.lane.b32.xlu0 %v587, 4
  %v590 = vpop.permute.xlu0 %589
  %v592 = vmul.f32 %v574, %v590
  %594 = vset.pattern.permute.xlu0 6
  %595 = vperm.xlu0 %594, %v592
  %v596 = vpop.permute.xlu0 %595
  %v598 = vmul.f32 %v596, %v24
  %599 = vset.pattern.permute.xlu0 7
  %600 = vperm.xlu0 %599, %v592
  %v601 = vpop.permute.xlu0 %600
  %v603 = vmul.f32 %v601, %v26
  %v604 = vadd.f32 %v598, %v603
  %v605 = vmax.f32 %v592, 0.0
  %607 = vset.pattern.permute.xlu0 6
  %608 = vperm.xlu0 %607, %v605
  %v609 = vpop.permute.xlu0 %608
  %v611 = vmul.f32 %v609, %v32
  %612 = vset.pattern.permute.xlu0 7
  %613 = vperm.xlu0 %612, %v605
  %v614 = vpop.permute.xlu0 %613
  %v616 = vmul.f32 %v614, %v34
  %v617 = vadd.f32 %v611, %v616
  %v618 = vadd.f32 %v617, %v36
  %619 = vst [vmem:[#allocation2 + $0x6] sm:$0x3] %v618
  %v620 = vld [vmem:[%s0 + $0x8] sm:$0x3]
  %622 = vset.pattern.permute.xlu0 0
  %623 = vperm.xlu0 %622, %v620
  %v624 = vpop.permute.xlu0 %623
  %v626 = vmul.f32 %v624, %v12
  %v627 = vadd.f32 %v28, %v626
  %628 = vset.pattern.permute.xlu0 1
  %629 = vperm.xlu0 %628, %v620
  %v630 = vpop.permute.xlu0 %629
  %v632 = vmul.f32 %v630, %v14
  %v633 = vadd.f32 %v627, %v632
  %634 = vset.pattern.permute.xlu0 2
  %635 = vperm.xlu0 %634, %v620
  %v636 = vpop.permute.xlu0 %635
  %v638 = vmul.f32 %v636, %v16
  %v639 = vadd.f32 %v633, %v638
  %640 = vset.pattern.permute.xlu0 3
  %641 = vperm.xlu0 %640, %v620
  %v642 = vpop.permute.xlu0 %641
  %v644 = vmul.f32 %v642, %v18
  %v645 = vadd.f32 %v639, %v644
  %647 = vrot.lane.b32.xlu0 %v553, 120
  %v648 = vpop.permute.xlu0 %647
  %v650 = vadd.f32 %v645, %v648
  %v651 = vxor.u32 %v650, 2147483648
  %v652 = vmul.f32 %v651, 1.442695
  %v653 = vpow.pop %v652
  %v654 = vadd.f32 %v653, 1.0
  %v655 = vrcp.pop %v654
  %v656 = vmul.f32 %v654, %v655
  %v657 = vsub.f32 1.0, %v656
  %v658 = vmul.f32 %v655, %v657
  %v659 = vadd.f32 %v655, %v658
  %vm660 = vweird.f32 %v654
  %vm661 = vweird.f32 %v655
  %vm662 = vmor %vm660, %vm661
  %v663 = vsel %vm662, %v655, %v659
  %v664 = vand.u32 2147483647, %v654
  %vm665 = vcmp.eq.f32.partialorder %v664, 8.507059e+37
  %v666 = vand.u32 %v654, 2147483648
  %v667 = vor.u32 1.1754944e-38, %v666
  %v668 = vsel %vm665, %v667, %v663
  %v669 = vmul.f32 1.0, %v668
  %v670 = vtanh.pop %v650
  %v671 = vmul.f32 %v669, %v535
  %673 = vrot.lane.b32.xlu0 %v670, 124
  %v674 = vpop.permute.xlu0 %673
  %v676 = vmul.f32 %v669, %v674
  %678 = vrot.lane.b32.xlu0 %v676, 2
  %v679 = vpop.permute.xlu0 %678
  %v681 = vadd.f32 %v671, %v679
  %v682 = vtanh.pop %v681
  %684 = vrot.lane.b32.xlu0 %v682, 4
  %v685 = vpop.permute.xlu0 %684
  %v687 = vmul.f32 %v669, %v685
  %689 = vset.pattern.permute.xlu0 6
  %690 = vperm.xlu0 %689, %v687
  %v691 = vpop.permute.xlu0 %690
  %v693 = vmul.f32 %v691, %v20
  %694 = vset.pattern.permute.xlu0 7
  %695 = vperm.xlu0 %694, %v687
  %v696 = vpop.permute.xlu0 %695
  %v698 = vmul.f32 %v696, %v22
  %v699 = vadd.f32 %v693, %v698
  %v700 = vadd.f32 %v699, %v604
  %v701 = vadd.f32 %v700, %v30
  %v702 = vxor.u32 %v701, 2147483648
  %v703 = vmul.f32 %v702, 1.442695
  %v704 = vpow.pop %v703
  %v705 = vadd.f32 %v704, 1.0
  %v706 = vrcp.pop %v705
  %v707 = vmul.f32 %v705, %v706
  %v708 = vsub.f32 1.0, %v707
  %v709 = vmul.f32 %v706, %v708
  %v710 = vadd.f32 %v706, %v709
  %vm711 = vweird.f32 %v705
  %vm712 = vweird.f32 %v706
  %vm713 = vmor %vm711, %vm712
  %v714 = vsel %vm713, %v706, %v710
  %v715 = vand.u32 2147483647, %v705
  %vm716 = vcmp.eq.f32.partialorder %v715, 8.507059e+37
  %v717 = vand.u32 %v705, 2147483648
  %v718 = vor.u32 1.1754944e-38, %v717
  %v719 = vsel %vm716, %v718, %v714
  %v720 = vmul.f32 1.0, %v719
  %v721 = vtanh.pop %v701
  %v722 = vmul.f32 %v720, %v586
  %724 = vrot.lane.b32.xlu0 %v721, 124
  %v725 = vpop.permute.xlu0 %724
  %v727 = vmul.f32 %v720, %v725
  %729 = vrot.lane.b32.xlu0 %v727, 2
  %v730 = vpop.permute.xlu0 %729
  %v732 = vadd.f32 %v722, %v730
  %v733 = vtanh.pop %v732
  %735 = vrot.lane.b32.xlu0 %v733, 4
  %v736 = vpop.permute.xlu0 %735
  %v738 = vmul.f32 %v720, %v736
  %740 = vset.pattern.permute.xlu0 6
  %741 = vperm.xlu0 %740, %v738
  %v742 = vpop.permute.xlu0 %741
  %v744 = vmul.f32 %v742, %v24
  %745 = vset.pattern.permute.xlu0 7
  %746 = vperm.xlu0 %745, %v738
  %v747 = vpop.permute.xlu0 %746
  %v749 = vmul.f32 %v747, %v26
  %v750 = vadd.f32 %v744, %v749
  %v751 = vmax.f32 %v738, 0.0
  %753 = vset.pattern.permute.xlu0 6
  %754 = vperm.xlu0 %753, %v751
  %v755 = vpop.permute.xlu0 %754
  %v757 = vmul.f32 %v755, %v32
  %758 = vset.pattern.permute.xlu0 7
  %759 = vperm.xlu0 %758, %v751
  %v760 = vpop.permute.xlu0 %759
  %v762 = vmul.f32 %v760, %v34
  %v763 = vadd.f32 %v757, %v762
  %v764 = vadd.f32 %v763, %v36
  %765 = vst [vmem:[#allocation2 + $0x8] sm:$0x3] %v764
  %v766 = vld [vmem:[%s0 + $0xa] sm:$0x3]
  %768 = vset.pattern.permute.xlu0 0
  %769 = vperm.xlu0 %768, %v766
  %v770 = vpop.permute.xlu0 %769
  %v772 = vmul.f32 %v770, %v12
  %v773 = vadd.f32 %v28, %v772
  %774 = vset.pattern.permute.xlu0 1
  %775 = vperm.xlu0 %774, %v766
  %v776 = vpop.permute.xlu0 %775
  %v778 = vmul.f32 %v776, %v14
  %v779 = vadd.f32 %v773, %v778
  %780 = vset.pattern.permute.xlu0 2
  %781 = vperm.xlu0 %780, %v766
  %v782 = vpop.permute.xlu0 %781
  %v784 = vmul.f32 %v782, %v16
  %v785 = vadd.f32 %v779, %v784
  %786 = vset.pattern.permute.xlu0 3
  %787 = vperm.xlu0 %786, %v766
  %v788 = vpop.permute.xlu0 %787
  %v790 = vmul.f32 %v788, %v18
  %v791 = vadd.f32 %v785, %v790
  %793 = vrot.lane.b32.xlu0 %v699, 120
  %v794 = vpop.permute.xlu0 %793
  %v796 = vadd.f32 %v791, %v794
  %v797 = vxor.u32 %v796, 2147483648
  %v798 = vmul.f32 %v797, 1.442695
  %v799 = vpow.pop %v798
  %v800 = vadd.f32 %v799, 1.0
  %v801 = vrcp.pop %v800
  %v802 = vmul.f32 %v800, %v801
  %v803 = vsub.f32 1.0, %v802
  %v804 = vmul.f32 %v801, %v803
  %v805 = vadd.f32 %v801, %v804
  %vm806 = vweird.f32 %v800
  %vm807 = vweird.f32 %v801
  %vm808 = vmor %vm806, %vm807
  %v809 = vsel %vm808, %v801, %v805
  %v810 = vand.u32 2147483647, %v800
  %vm811 = vcmp.eq.f32.partialorder %v810, 8.507059e+37
  %v812 = vand.u32 %v800, 2147483648
  %v813 = vor.u32 1.1754944e-38, %v812
  %v814 = vsel %vm811, %v813, %v809
  %v815 = vmul.f32 1.0, %v814
  %v816 = vtanh.pop %v796
  %v817 = vmul.f32 %v815, %v681
  %819 = vrot.lane.b32.xlu0 %v816, 124
  %v820 = vpop.permute.xlu0 %819
  %v822 = vmul.f32 %v815, %v820
  %824 = vrot.lane.b32.xlu0 %v822, 2
  %v825 = vpop.permute.xlu0 %824
  %v827 = vadd.f32 %v817, %v825
  %v828 = vtanh.pop %v827
  %830 = vrot.lane.b32.xlu0 %v828, 4
  %v831 = vpop.permute.xlu0 %830
  %v833 = vmul.f32 %v815, %v831
  %835 = vset.pattern.permute.xlu0 6
  %836 = vperm.xlu0 %835, %v833
  %v837 = vpop.permute.xlu0 %836
  %v839 = vmul.f32 %v837, %v20
  %840 = vset.pattern.permute.xlu0 7
  %841 = vperm.xlu0 %840, %v833
  %v842 = vpop.permute.xlu0 %841
  %v844 = vmul.f32 %v842, %v22
  %v845 = vadd.f32 %v839, %v844
  %v846 = vadd.f32 %v845, %v750
  %v847 = vadd.f32 %v846, %v30
  %v848 = vxor.u32 %v847, 2147483648
  %v849 = vmul.f32 %v848, 1.442695
  %v850 = vpow.pop %v849
  %v851 = vadd.f32 %v850, 1.0
  %v852 = vrcp.pop %v851
  %v853 = vmul.f32 %v851, %v852
  %v854 = vsub.f32 1.0, %v853
  %v855 = vmul.f32 %v852, %v854
  %v856 = vadd.f32 %v852, %v855
  %vm857 = vweird.f32 %v851
  %vm858 = vweird.f32 %v852
  %vm859 = vmor %vm857, %vm858
  %v860 = vsel %vm859, %v852, %v856
  %v861 = vand.u32 2147483647, %v851
  %vm862 = vcmp.eq.f32.partialorder %v861, 8.507059e+37
  %v863 = vand.u32 %v851, 2147483648
  %v864 = vor.u32 1.1754944e-38, %v863
  %v865 = vsel %vm862, %v864, %v860
  %v866 = vmul.f32 1.0, %v865
  %v867 = vtanh.pop %v847
  %v868 = vmul.f32 %v866, %v732
  %870 = vrot.lane.b32.xlu0 %v867, 124
  %v871 = vpop.permute.xlu0 %870
  %v873 = vmul.f32 %v866, %v871
  %875 = vrot.lane.b32.xlu0 %v873, 2
  %v876 = vpop.permute.xlu0 %875
  %v878 = vadd.f32 %v868, %v876
  %v879 = vtanh.pop %v878
  %881 = vrot.lane.b32.xlu0 %v879, 4
  %v882 = vpop.permute.xlu0 %881
  %v884 = vmul.f32 %v866, %v882
  %886 = vset.pattern.permute.xlu0 6
  %887 = vperm.xlu0 %886, %v884
  %v888 = vpop.permute.xlu0 %887
  %v890 = vmul.f32 %v888, %v24
  %891 = vset.pattern.permute.xlu0 7
  %892 = vperm.xlu0 %891, %v884
  %v893 = vpop.permute.xlu0 %892
  %v895 = vmul.f32 %v893, %v26
  %v896 = vadd.f32 %v890, %v895
  %v897 = vmax.f32 %v884, 0.0
  %899 = vset.pattern.permute.xlu0 6
  %900 = vperm.xlu0 %899, %v897
  %v901 = vpop.permute.xlu0 %900
  %v903 = vmul.f32 %v901, %v32
  %904 = vset.pattern.permute.xlu0 7
  %905 = vperm.xlu0 %904, %v897
  %v906 = vpop.permute.xlu0 %905
  %v908 = vmul.f32 %v906, %v34
  %v909 = vadd.f32 %v903, %v908
  %v910 = vadd.f32 %v909, %v36
  %911 = vst [vmem:[#allocation2 + $0xa] sm:$0x3] %v910
  %v912 = vld [vmem:[%s0 + $0xc] sm:$0x3]
  %914 = vset.pattern.permute.xlu0 0
  %915 = vperm.xlu0 %914, %v912
  %v916 = vpop.permute.xlu0 %915
  %v918 = vmul.f32 %v916, %v12
  %v919 = vadd.f32 %v28, %v918
  %920 = vset.pattern.permute.xlu0 1
  %921 = vperm.xlu0 %920, %v912
  %v922 = vpop.permute.xlu0 %921
  %v924 = vmul.f32 %v922, %v14
  %v925 = vadd.f32 %v919, %v924
  %926 = vset.pattern.permute.xlu0 2
  %927 = vperm.xlu0 %926, %v912
  %v928 = vpop.permute.xlu0 %927
  %v930 = vmul.f32 %v928, %v16
  %v931 = vadd.f32 %v925, %v930
  %932 = vset.pattern.permute.xlu0 3
  %933 = vperm.xlu0 %932, %v912
  %v934 = vpop.permute.xlu0 %933
  %v936 = vmul.f32 %v934, %v18
  %v937 = vadd.f32 %v931, %v936
  %939 = vrot.lane.b32.xlu0 %v845, 120
  %v940 = vpop.permute.xlu0 %939
  %v942 = vadd.f32 %v937, %v940
  %v943 = vxor.u32 %v942, 2147483648
  %v944 = vmul.f32 %v943, 1.442695
  %v945 = vpow.pop %v944
  %v946 = vadd.f32 %v945, 1.0
  %v947 = vrcp.pop %v946
  %v948 = vmul.f32 %v946, %v947
  %v949 = vsub.f32 1.0, %v948
  %v950 = vmul.f32 %v947, %v949
  %v951 = vadd.f32 %v947, %v950
  %vm952 = vweird.f32 %v946
  %vm953 = vweird.f32 %v947
  %vm954 = vmor %vm952, %vm953
  %v955 = vsel %vm954, %v947, %v951
  %v956 = vand.u32 2147483647, %v946
  %vm957 = vcmp.eq.f32.partialorder %v956, 8.507059e+37
  %v958 = vand.u32 %v946, 2147483648
  %v959 = vor.u32 1.1754944e-38, %v958
  %v960 = vsel %vm957, %v959, %v955
  %v961 = vmul.f32 1.0, %v960
  %v962 = vtanh.pop %v942
  %v963 = vmul.f32 %v961, %v827
  %965 = vrot.lane.b32.xlu0 %v962, 124
  %v966 = vpop.permute.xlu0 %965
  %v968 = vmul.f32 %v961, %v966
  %970 = vrot.lane.b32.xlu0 %v968, 2
  %v971 = vpop.permute.xlu0 %970
  %v973 = vadd.f32 %v963, %v971
  %v974 = vtanh.pop %v973
  %976 = vrot.lane.b32.xlu0 %v974, 4
  %v977 = vpop.permute.xlu0 %976
  %v979 = vmul.f32 %v961, %v977
  %981 = vset.pattern.permute.xlu0 6
  %982 = vperm.xlu0 %981, %v979
  %v983 = vpop.permute.xlu0 %982
  %v985 = vmul.f32 %v983, %v20
  %986 = vset.pattern.permute.xlu0 7
  %987 = vperm.xlu0 %986, %v979
  %v988 = vpop.permute.xlu0 %987
  %v990 = vmul.f32 %v988, %v22
  %v991 = vadd.f32 %v985, %v990
  %v992 = vadd.f32 %v991, %v896
  %v993 = vadd.f32 %v992, %v30
  %v994 = vxor.u32 %v993, 2147483648
  %v995 = vmul.f32 %v994, 1.442695
  %v996 = vpow.pop %v995
  %v997 = vadd.f32 %v996, 1.0
  %v998 = vrcp.pop %v997
  %v999 = vmul.f32 %v997, %v998
  %v1000 = vsub.f32 1.0, %v999
  %v1001 = vmul.f32 %v998, %v1000
  %v1002 = vadd.f32 %v998, %v1001
  %vm1003 = vweird.f32 %v997
  %vm1004 = vweird.f32 %v998
  %vm1005 = vmor %vm1003, %vm1004
  %v1006 = vsel %vm1005, %v998, %v1002
  %v1007 = vand.u32 2147483647, %v997
  %vm1008 = vcmp.eq.f32.partialorder %v1007, 8.507059e+37
  %v1009 = vand.u32 %v997, 2147483648
  %v1010 = vor.u32 1.1754944e-38, %v1009
  %v1011 = vsel %vm1008, %v1010, %v1006
  %v1012 = vmul.f32 1.0, %v1011
  %v1013 = vtanh.pop %v993
  %v1014 = vmul.f32 %v1012, %v878
  %1016 = vrot.lane.b32.xlu0 %v1013, 124
  %v1017 = vpop.permute.xlu0 %1016
  %v1019 = vmul.f32 %v1012, %v1017
  %1021 = vrot.lane.b32.xlu0 %v1019, 2
  %v1022 = vpop.permute.xlu0 %1021
  %v1024 = vadd.f32 %v1014, %v1022
  %v1025 = vtanh.pop %v1024
  %1027 = vrot.lane.b32.xlu0 %v1025, 4
  %v1028 = vpop.permute.xlu0 %1027
  %v1030 = vmul.f32 %v1012, %v1028
  %1032 = vset.pattern.permute.xlu0 6
  %1033 = vperm.xlu0 %1032, %v1030
  %v1034 = vpop.permute.xlu0 %1033
  %v1036 = vmul.f32 %v1034, %v24
  %1037 = vset.pattern.permute.xlu0 7
  %1038 = vperm.xlu0 %1037, %v1030
  %v1039 = vpop.permute.xlu0 %1038
  %v1041 = vmul.f32 %v1039, %v26
  %v1042 = vadd.f32 %v1036, %v1041
  %v1043 = vmax.f32 %v1030, 0.0
  %1045 = vset.pattern.permute.xlu0 6
  %1046 = vperm.xlu0 %1045, %v1043
  %v1047 = vpop.permute.xlu0 %1046
  %v1049 = vmul.f32 %v1047, %v32
  %1050 = vset.pattern.permute.xlu0 7
  %1051 = vperm.xlu0 %1050, %v1043
  %v1052 = vpop.permute.xlu0 %1051
  %v1054 = vmul.f32 %v1052, %v34
  %v1055 = vadd.f32 %v1049, %v1054
  %v1056 = vadd.f32 %v1055, %v36
  %1057 = vst [vmem:[#allocation2 + $0xc] sm:$0x3] %v1056
  %v1058 = vld [vmem:[%s0 + $0xe] sm:$0x3]
  %1060 = vset.pattern.permute.xlu0 0
  %1061 = vperm.xlu0 %1060, %v1058
  %v1062 = vpop.permute.xlu0 %1061
  %v1064 = vmul.f32 %v1062, %v12
  %v1065 = vadd.f32 %v28, %v1064
  %1066 = vset.pattern.permute.xlu0 1
  %1067 = vperm.xlu0 %1066, %v1058
  %v1068 = vpop.permute.xlu0 %1067
  %v1070 = vmul.f32 %v1068, %v14
  %v1071 = vadd.f32 %v1065, %v1070
  %1072 = vset.pattern.permute.xlu0 2
  %1073 = vperm.xlu0 %1072, %v1058
  %v1074 = vpop.permute.xlu0 %1073
  %v1076 = vmul.f32 %v1074, %v16
  %v1077 = vadd.f32 %v1071, %v1076
  %1078 = vset.pattern.permute.xlu0 3
  %1079 = vperm.xlu0 %1078, %v1058
  %v1080 = vpop.permute.xlu0 %1079
  %v1082 = vmul.f32 %v1080, %v18
  %v1083 = vadd.f32 %v1077, %v1082
  %1085 = vrot.lane.b32.xlu0 %v991, 120
  %v1086 = vpop.permute.xlu0 %1085
  %v1088 = vadd.f32 %v1083, %v1086
  %v1089 = vxor.u32 %v1088, 2147483648
  %v1090 = vmul.f32 %v1089, 1.442695
  %v1091 = vpow.pop %v1090
  %v1092 = vadd.f32 %v1091, 1.0
  %v1093 = vrcp.pop %v1092
  %v1094 = vmul.f32 %v1092, %v1093
  %v1095 = vsub.f32 1.0, %v1094
  %v1096 = vmul.f32 %v1093, %v1095
  %v1097 = vadd.f32 %v1093, %v1096
  %vm1098 = vweird.f32 %v1092
  %vm1099 = vweird.f32 %v1093
  %vm1100 = vmor %vm1098, %vm1099
  %v1101 = vsel %vm1100, %v1093, %v1097
  %v1102 = vand.u32 2147483647, %v1092
  %vm1103 = vcmp.eq.f32.partialorder %v1102, 8.507059e+37
  %v1104 = vand.u32 %v1092, 2147483648
  %v1105 = vor.u32 1.1754944e-38, %v1104
  %v1106 = vsel %vm1103, %v1105, %v1101
  %v1107 = vmul.f32 1.0, %v1106
  %v1108 = vtanh.pop %v1088
  %v1109 = vmul.f32 %v1107, %v973
  %1111 = vrot.lane.b32.xlu0 %v1108, 124
  %v1112 = vpop.permute.xlu0 %1111
  %v1114 = vmul.f32 %v1107, %v1112
  %1116 = vrot.lane.b32.xlu0 %v1114, 2
  %v1117 = vpop.permute.xlu0 %1116
  %v1119 = vadd.f32 %v1109, %v1117
  %v1120 = vtanh.pop %v1119
  %1122 = vrot.lane.b32.xlu0 %v1120, 4
  %v1123 = vpop.permute.xlu0 %1122
  %v1125 = vmul.f32 %v1107, %v1123
  %1127 = vset.pattern.permute.xlu0 6
  %1128 = vperm.xlu0 %1127, %v1125
  %v1129 = vpop.permute.xlu0 %1128
  %v1131 = vmul.f32 %v1129, %v20
  %1132 = vset.pattern.permute.xlu0 7
  %1133 = vperm.xlu0 %1132, %v1125
  %v1134 = vpop.permute.xlu0 %1133
  %v1136 = vmul.f32 %v1134, %v22
  %v1137 = vadd.f32 %v1131, %v1136
  %v1138 = vadd.f32 %v1137, %v1042
  %v1139 = vadd.f32 %v1138, %v30
  %v1140 = vxor.u32 %v1139, 2147483648
  %v1141 = vmul.f32 %v1140, 1.442695
  %v1142 = vpow.pop %v1141
  %v1143 = vadd.f32 %v1142, 1.0
  %v1144 = vrcp.pop %v1143
  %v1145 = vmul.f32 %v1143, %v1144
  %v1146 = vsub.f32 1.0, %v1145
  %v1147 = vmul.f32 %v1144, %v1146
  %v1148 = vadd.f32 %v1144, %v1147
  %vm1149 = vweird.f32 %v1143
  %vm1150 = vweird.f32 %v1144
  %vm1151 = vmor %vm1149, %vm1150
  %v1152 = vsel %vm1151, %v1144, %v1148
  %v1153 = vand.u32 2147483647, %v1143
  %vm1154 = vcmp.eq.f32.partialorder %v1153, 8.507059e+37
  %v1155 = vand.u32 %v1143, 2147483648
  %v1156 = vor.u32 1.1754944e-38, %v1155
  %v1157 = vsel %vm1154, %v1156, %v1152
  %v1158 = vmul.f32 1.0, %v1157
  %v1159 = vtanh.pop %v1139
  %v1160 = vmul.f32 %v1158, %v1024
  %1162 = vrot.lane.b32.xlu0 %v1159, 124
  %v1163 = vpop.permute.xlu0 %1162
  %v1165 = vmul.f32 %v1158, %v1163
  %1167 = vrot.lane.b32.xlu0 %v1165, 2
  %v1168 = vpop.permute.xlu0 %1167
  %v1170 = vadd.f32 %v1160, %v1168
  %v1171 = vtanh.pop %v1170
  %1173 = vrot.lane.b32.xlu0 %v1171, 4
  %v1174 = vpop.permute.xlu0 %1173
  %v1176 = vmul.f32 %v1158, %v1174
  %v1177 = vmax.f32 %v1176, 0.0
  %1179 = vset.pattern.permute.xlu0 6
  %1180 = vperm.xlu0 %1179, %v1177
  %v1181 = vpop.permute.xlu0 %1180
  %v1183 = vmul.f32 %v1181, %v32
  %1184 = vset.pattern.permute.xlu0 7
  %1185 = vperm.xlu0 %1184, %v1177
  %v1186 = vpop.permute.xlu0 %1185
  %v1188 = vmul.f32 %v1186, %v34
  %v1189 = vadd.f32 %v1183, %v1188
  %v1190 = vadd.f32 %v1189, %v36
  %1191 = vst [vmem:[#allocation2 + $0xe] sm:$0x3] %v1190
  %v1192 = vld [vmem:[#allocation2] sm:$0xff]
  %v1193 = vld [vmem:[#allocation2 + $0x8] sm:$0xff]
  %v1194 = vmax.f32 %v1192, 0.0
  %v1195 = vmax.f32 %v1193, 0.0
  %v1196 = vmul.f32 %v1194, %v38
  %v1197 = vmul.f32 %v1195, %v38
  %1198 = vadd.xlane.f32.xlu0 %v1196
  %v1199 = vpop.xlane.xlu0 %1198
  %1200 = vadd.xlane.f32.xlu0 %v1197
  %v1201 = vpop.xlane.xlu0 %1200
  %v1202 = vperm.slane %v39, 0
  %v1203 = vadd.f32 %v1199, %v1202
  %v1204 = vadd.f32 %v1201, %v1202
  %vm1205 = vcmask 7168
  %1206 = vst.msk [vmem:[%s2] sm:$0xff] %vm1205, %v1203
  %1207 = vst.msk [vmem:[%s2 + $0x8] sm:$0xff] %vm1205, %v1204
  // Predicated region
  $region10: #{lstm1_forward.1} parent=0 // pred_check
    _
  $region11: #{lstm1_forward.1} parent=0 // pred_check_branch
    %1209 = sbr.rel (0) target = $region13
  $region12: #{lstm1_forward.1} parent=0 // pred_region
    _
  $region13: #{lstm1_forward.1} parent=0 // pred_fallthru
    _
  // Predicated region
  $region14: #{lstm1_forward.1} parent=0 // pred_check
    _
  $region15: #{lstm1_forward.1} parent=0 // pred_check_branch
    %1211 = sbr.rel (0) target = $region17
  $region16: #{lstm1_forward.1} parent=0 // pred_region
    _
  $region17: #{lstm1_forward.1} parent=0 // pred_fallthru
    _

</llo_original>
